<compile_context>
chip_gen: v6e
topology: v6e:2x2x1
jax: 0.10.0
libtpu: 0.0.40
codegen_flags: <defaults>
</compile_context>

<pallas_src>
import jax
import jax.numpy as jnp
from jax.experimental import pallas as pl
from jax.experimental.pallas import tpu as pltpu

NUM_LAYERS = 2    # only 2 supported in this kernel (see TODO above)
TILE_H = 8        # conv2 output rows per grid step (must divide H)
LANES = 128       # TPU lane width; conv1-K, channel and output padding target


def _feat_loss_kernel(col1_ref, w1_ref, w2_ref, out_ref, col2_ref):
  """One grid step = one (image pair, row tile).

  col1_ref : (1, 1, 2*(th+2)*Wp, 128) bf16  lane-dense conv1 im2col (+ bias ones
                                            column), inp rows then targ rows;
                                            conv2-halo rows are all-zero.
  w1_ref   : (128, 128)   bf16  conv1 taps (rows 0..26) + bias row (27), padded.
  w2_ref   : (1152, 128)  f32   conv2 taps, one 128-lane-aligned slot per tap.
  out_ref  : (1, 1, 128)  f32   per-(pair, tile) per-channel sum of squared diffs.
  col2_ref : (th, W, 1152) f32  VMEM conv2 im2col scratch (fully overwritten).
  """
  m2 = col1_ref.shape[2]             # 2 * (th+2) * Wp
  mh = m2 // 2
  th, tw, k2 = col2_ref.shape        # (tile_h, W, 9*128)
  lanes = w1_ref.shape[1]            # 128
  wp = mh // (th + 2)                # padded row width (>= W+2, multiple of 8)

  # ---- layer_01 conv (+ folded bias) and layer_02 ReLU: one MXU matmul ------
  x = col1_ref[...].reshape(m2, col1_ref.shape[3])
  y1 = jnp.maximum(
      jnp.dot(x, w1_ref[...], preferred_element_type=jnp.float32), 0.0)

  # ---- layer_02 conv applied ONCE to the ReLU-feature difference ------------
  # conv2 is linear and its bias is common to both branches, so it cancels
  # exactly in feat(inp) - feat(targ).  Keep the difference in f32.
  d1 = (y1[:mh] - y1[mh:]).reshape(th + 2, wp, lanes)

  # conv2 im2col: 9 lane-aligned, 128-wide dense tap stores (no masked vst).
  for k in range(9):
    dy, dx = divmod(k, 3)
    col2_ref[:, :, k * lanes:(k + 1) * lanes] = d1[dy:dy + th, dx:dx + tw, :]

  d2 = jnp.dot(col2_ref[...].reshape(th * tw, k2), w2_ref[...],
               preferred_element_type=jnp.float32)   # = feat(inp) - feat(targ)

  # per-channel partial sums; cross-lane reduce + mean finish in the wrapper.
  out_ref[...] = jnp.sum(d2 * d2, axis=0, keepdims=True).reshape(1, 1, lanes)


@jax.jit
def feat_loss(inp_nchw, targ_nchw, w1, b1, w2, b2):
  """inp/targ: (N, C, H, W) like PyTorch. w1: (9,Cin,C1), w2: (9,C1,C2).

  b2 is accepted for API parity but is mathematically irrelevant: the last
  conv's bias appears in both feature maps and cancels in the MSE difference.
  """
  del b2
  N, Cin, H, W = inp_nchw.shape
  C1, C2 = w1.shape[-1], w2.shape[-1]
  assert 9 * Cin + 1 <= LANES and C1 <= LANES and C2 <= LANES
  th = min(TILE_H, H)
  assert H % th == 0, "H must be divisible by TILE_H"
  n_tiles = H // th
  Wp = ((W + 2 + 7) // 8) * 8          # W + conv2 halo, rounded up for sublane alignment
  K2 = 9 * LANES

  # ---------------- wrapper-side layout plumbing (zero FLOPs) ----------------
  # Stack inp/targ, NCHW -> NHWC, conv1 SAME padding, im2col, fold bias ones,
  # pad K to 128 lanes, then bake conv2's zero halo in as all-zero col1 rows.
  x = jnp.stack([inp_nchw, targ_nchw], axis=1)                   # (N,2,Cin,H,W)
  x = jnp.transpose(x, (0, 1, 3, 4, 2)).astype(jnp.float32)      # (N,2,H,W,Cin)
  xp = jnp.pad(x, ((0, 0), (0, 0), (1, 1), (1, 1), (0, 0)))
  taps = [xp[:, :, dy:dy + H, dx:dx + W, :]
          for dy in range(3) for dx in range(3)]
  cols = jnp.concatenate(taps + [jnp.ones_like(x[..., :1])], axis=-1)
  cols = jnp.pad(cols, ((0, 0), (0, 0), (0, 0), (0, 0),
                        (0, LANES - cols.shape[-1])))             # (N,2,H,W,128)
  colsp = jnp.pad(cols, ((0, 0), (0, 0), (1, 1), (1, Wp - W - 1), (0, 0)))
  # per-tile blocks with a 1-row halo (overlap materialized here, not in-kernel)
  tiles = [colsp[:, :, t * th: t * th + th + 2] for t in range(n_tiles)]
  col1 = jnp.stack(tiles, axis=2)                                 # (N,2,T,th+2,Wp,128)
  col1 = jnp.transpose(col1, (0, 2, 1, 3, 4, 5))
  col1 = col1.reshape(N, n_tiles, 2 * (th + 2) * Wp, LANES).astype(jnp.bfloat16)

  # conv1 weights: im2col-flattened taps + bias row, padded to 128x128, bf16.
  w1p = jnp.zeros((LANES, LANES), jnp.float32)
  w1p = w1p.at[:9 * Cin, :C1].set(w1.reshape(9 * Cin, C1))
  w1p = w1p.at[9 * Cin, :C1].set(b1)
  w1p = w1p.astype(jnp.bfloat16)

  # conv2 weights: each tap gets a 128-lane-aligned slot; f32 (not MXU-bound).
  w2p = jnp.zeros((9, LANES, LANES), jnp.float32)
  w2p = w2p.at[:, :C1, :C2].set(w2)
  w2p = w2p.reshape(K2, LANES)

  m2 = 2 * (th + 2) * Wp
  partials = pl.pallas_call(
      _feat_loss_kernel,
      out_shape=jax.ShapeDtypeStruct((N * n_tiles, 1, LANES), jnp.float32),
      grid_spec=pltpu.PrefetchScalarGridSpec(
          num_scalar_prefetch=0,
          grid=(N, n_tiles),
          in_specs=[
              pl.BlockSpec((1, 1, m2, LANES), lambda b, t: (b, t, 0, 0)),
              pl.BlockSpec((LANES, LANES), lambda b, t: (0, 0)),
              pl.BlockSpec((K2, LANES), lambda b, t: (0, 0)),
          ],
          out_specs=pl.BlockSpec((1, 1, LANES),
                                 lambda b, t: (b * n_tiles + t, 0, 0)),
          scratch_shapes=[
              pltpu.VMEM((th, W, K2), jnp.float32),   # conv2 im2col scratch
          ],
      ),
      compiler_params=pltpu.CompilerParams(
          dimension_semantics=("parallel", "parallel"),
          vmem_limit_bytes=32 * 1024 * 1024),
  )(col1, w1p, w2p)

  return jnp.sum(partials) / (N * H * W * C2)


def _reference_feat_loss(inp_nchw, targ_nchw, w1, b1, w2, b2):
  """Plain-JAX f32 reference (same math as the PyTorch module with these weights)."""
  inp = jnp.transpose(inp_nchw, (0, 2, 3, 1)).astype(jnp.float32)
  targ = jnp.transpose(targ_nchw, (0, 2, 3, 1)).astype(jnp.float32)
  Cin, C1 = w1.shape[1], w1.shape[2]
  C2 = w2.shape[2]
  w1_hwio = w1.reshape(3, 3, Cin, C1)
  w2_hwio = w2.reshape(3, 3, C1, C2)
  dn = ('NHWC', 'HWIO', 'NHWC')

  def feat(x):
    y = jax.lax.conv_general_dilated(x, w1_hwio, (1, 1), 'SAME',
                                     dimension_numbers=dn) + b1
    y = jnp.maximum(y, 0.0)
    y = jax.lax.conv_general_dilated(y, w2_hwio, (1, 1), 'SAME',
                                     dimension_numbers=dn) + b2
    return y

  fi, ft = feat(inp), feat(targ)
  return jnp.mean((fi - ft) ** 2)


if __name__ == "__main__":
  # Small shapes consistent with the module's forward: RGB images, NCHW.
  N, Cin, H, W = 2, 3, 16, 16
  C1, C2 = 64, 64  # VGG19 first-block channel counts

  key = jax.random.PRNGKey(0)
  k_in, k_tg, k_w1, k_b1, k_w2, k_b2 = jax.random.split(key, 6)

  inp = jax.random.normal(k_in, (N, Cin, H, W), dtype=jnp.float32)
  targ = jax.random.normal(k_tg, (N, Cin, H, W), dtype=jnp.float32)

  # Deterministic synthetic conv weights (shapes per VGG19's first two convs),
  # stored as (9, Cin, Cout) = flattened 3x3 taps (k = dy*3 + dx).
  w1 = jax.random.normal(k_w1, (9, Cin, C1), dtype=jnp.float32) * (2.0 / (9 * Cin)) ** 0.5
  b1 = jax.random.normal(k_b1, (C1,), dtype=jnp.float32) * 0.05
  w2 = jax.random.normal(k_w2, (9, C1, C2), dtype=jnp.float32) * (2.0 / (9 * C1)) ** 0.5
  b2 = jax.random.normal(k_b2, (C2,), dtype=jnp.float32) * 0.05

  loss = feat_loss(inp, targ, w1, b1, w2, b2)
  jax.block_until_ready(loss)

  ref = _reference_feat_loss(inp, targ, w1, b1, w2, b2)
  assert jnp.allclose(loss, ref, rtol=5e-3, atol=1e-4), (loss, ref)

  print("KERNEL_OK")
</pallas_src>

<mosaic_0001>
module attributes {stable_mosaic.version = 11 : i64} {
  func.func @_feat_loss_kernel(%arg0: i32, %arg1: i32, %arg2: memref<1x1x480x128xbf16, #tpu.memory_space<vmem>>, %arg3: memref<128x128xbf16, #tpu.memory_space<vmem>>, %arg4: memref<1152x128xf32, #tpu.memory_space<vmem>>, %arg5: memref<1x1x128xf32, #tpu.memory_space<vmem>>, %arg6: memref<8x16x1152xf32, #tpu.memory_space<vmem>>) attributes {dimension_semantics = [#tpu.dimension_semantics<parallel>, #tpu.dimension_semantics<parallel>], iteration_bounds = array<i64: 2, 2>, scalar_prefetch = 0 : i64, scratch_operands = 1 : i64, tpu.core_type = #tpu.core_type<tc>, window_params = [{transform_indices = @transform_0, window_bounds = array<i64: 1, 1, 480, 128>}, {pipeline_mode = #tpu.pipeline_mode<synchronous>, transform_indices = @transform_1, window_bounds = array<i64: 128, 128>}, {pipeline_mode = #tpu.pipeline_mode<synchronous>, transform_indices = @transform_2, window_bounds = array<i64: 1152, 128>}, {transform_indices = @transform_3, window_bounds = array<i64: 1, 1, 128>}]} {
    %c0 = arith.constant 0 : index
    %c0_0 = arith.constant 0 : index
    %c0_1 = arith.constant 0 : index
    %c0_2 = arith.constant 0 : index
    %0 = vector.load %arg2[%c0, %c0_0, %c0_1, %c0_2] : memref<1x1x480x128xbf16, #tpu.memory_space<vmem>>, vector<1x1x480x128xbf16>
    %1 = vector.shape_cast %0 : vector<1x1x480x128xbf16> to vector<480x128xbf16>
    %c0_3 = arith.constant 0 : index
    %c0_4 = arith.constant 0 : index
    %2 = vector.load %arg3[%c0_3, %c0_4] : memref<128x128xbf16, #tpu.memory_space<vmem>>, vector<128x128xbf16>
    %cst = arith.constant dense<0.000000e+00> : vector<480x128xf32>
    %3 = tpu.matmul %1, %2, %cst {dimension_numbers = #tpu.dot_dimension_numbers<[1], [0], [0], [1], [0, 0, 1, 1], [], []>} : vector<480x128xbf16>, vector<128x128xbf16>, vector<480x128xf32> -> vector<480x128xf32>
    %cst_5 = arith.constant 0.000000e+00 : f32
    %4 = vector.broadcast %cst_5 : f32 to vector<480x128xf32>
    %5 = arith.maximumf %3, %4 : vector<480x128xf32>
    %6 = vector.extract_strided_slice %5 {offsets = [0, 0], sizes = [240, 128], strides = [1, 1]} : vector<480x128xf32> to vector<240x128xf32>
    %7 = vector.extract_strided_slice %5 {offsets = [240, 0], sizes = [240, 128], strides = [1, 1]} : vector<480x128xf32> to vector<240x128xf32>
    %8 = arith.subf %6, %7 : vector<240x128xf32>
    %9 = vector.shape_cast %8 : vector<240x128xf32> to vector<10x24x128xf32>
    %10 = vector.extract_strided_slice %9 {offsets = [0, 0, 0], sizes = [8, 16, 128], strides = [1, 1, 1]} : vector<10x24x128xf32> to vector<8x16x128xf32>
    %c0_6 = arith.constant 0 : index
    %c0_7 = arith.constant 0 : index
    %c0_8 = arith.constant 0 : index
    %11 = vector.load %arg6[%c0_6, %c0_7, %c0_8] : memref<8x16x1152xf32, #tpu.memory_space<vmem>>, vector<8x16x128xf32>
    tpu.vector_store %arg6[%c0_6, %c0_7, %c0_8], %10 {strides = array<i32>} : memref<8x16x1152xf32, #tpu.memory_space<vmem>>, vector<8x16x128xf32>,
    %12 = vector.extract_strided_slice %9 {offsets = [0, 1, 0], sizes = [8, 16, 128], strides = [1, 1, 1]} : vector<10x24x128xf32> to vector<8x16x128xf32>
    %c0_9 = arith.constant 0 : index
    %c0_10 = arith.constant 0 : index
    %c128 = arith.constant 128 : index
    %13 = vector.load %arg6[%c0_9, %c0_10, %c128] : memref<8x16x1152xf32, #tpu.memory_space<vmem>>, vector<8x16x128xf32>
    tpu.vector_store %arg6[%c0_9, %c0_10, %c128], %12 {strides = array<i32>} : memref<8x16x1152xf32, #tpu.memory_space<vmem>>, vector<8x16x128xf32>,
    %14 = vector.extract_strided_slice %9 {offsets = [0, 2, 0], sizes = [8, 16, 128], strides = [1, 1, 1]} : vector<10x24x128xf32> to vector<8x16x128xf32>
    %c0_11 = arith.constant 0 : index
    %c0_12 = arith.constant 0 : index
    %c256 = arith.constant 256 : index
    %15 = vector.load %arg6[%c0_11, %c0_12, %c256] : memref<8x16x1152xf32, #tpu.memory_space<vmem>>, vector<8x16x128xf32>
    tpu.vector_store %arg6[%c0_11, %c0_12, %c256], %14 {strides = array<i32>} : memref<8x16x1152xf32, #tpu.memory_space<vmem>>, vector<8x16x128xf32>,
    %16 = vector.extract_strided_slice %9 {offsets = [1, 0, 0], sizes = [8, 16, 128], strides = [1, 1, 1]} : vector<10x24x128xf32> to vector<8x16x128xf32>
    %c0_13 = arith.constant 0 : index
    %c0_14 = arith.constant 0 : index
    %c384 = arith.constant 384 : index
    %17 = vector.load %arg6[%c0_13, %c0_14, %c384] : memref<8x16x1152xf32, #tpu.memory_space<vmem>>, vector<8x16x128xf32>
    tpu.vector_store %arg6[%c0_13, %c0_14, %c384], %16 {strides = array<i32>} : memref<8x16x1152xf32, #tpu.memory_space<vmem>>, vector<8x16x128xf32>,
    %18 = vector.extract_strided_slice %9 {offsets = [1, 1, 0], sizes = [8, 16, 128], strides = [1, 1, 1]} : vector<10x24x128xf32> to vector<8x16x128xf32>
    %c0_15 = arith.constant 0 : index
    %c0_16 = arith.constant 0 : index
    %c512 = arith.constant 512 : index
    %19 = vector.load %arg6[%c0_15, %c0_16, %c512] : memref<8x16x1152xf32, #tpu.memory_space<vmem>>, vector<8x16x128xf32>
    tpu.vector_store %arg6[%c0_15, %c0_16, %c512], %18 {strides = array<i32>} : memref<8x16x1152xf32, #tpu.memory_space<vmem>>, vector<8x16x128xf32>,
    %20 = vector.extract_strided_slice %9 {offsets = [1, 2, 0], sizes = [8, 16, 128], strides = [1, 1, 1]} : vector<10x24x128xf32> to vector<8x16x128xf32>
    %c0_17 = arith.constant 0 : index
    %c0_18 = arith.constant 0 : index
    %c640 = arith.constant 640 : index
    %21 = vector.load %arg6[%c0_17, %c0_18, %c640] : memref<8x16x1152xf32, #tpu.memory_space<vmem>>, vector<8x16x128xf32>
    tpu.vector_store %arg6[%c0_17, %c0_18, %c640], %20 {strides = array<i32>} : memref<8x16x1152xf32, #tpu.memory_space<vmem>>, vector<8x16x128xf32>,
    %22 = vector.extract_strided_slice %9 {offsets = [2, 0, 0], sizes = [8, 16, 128], strides = [1, 1, 1]} : vector<10x24x128xf32> to vector<8x16x128xf32>
    %c0_19 = arith.constant 0 : index
    %c0_20 = arith.constant 0 : index
    %c768 = arith.constant 768 : index
    %23 = vector.load %arg6[%c0_19, %c0_20, %c768] : memref<8x16x1152xf32, #tpu.memory_space<vmem>>, vector<8x16x128xf32>
    tpu.vector_store %arg6[%c0_19, %c0_20, %c768], %22 {strides = array<i32>} : memref<8x16x1152xf32, #tpu.memory_space<vmem>>, vector<8x16x128xf32>,
    %24 = vector.extract_strided_slice %9 {offsets = [2, 1, 0], sizes = [8, 16, 128], strides = [1, 1, 1]} : vector<10x24x128xf32> to vector<8x16x128xf32>
    %c0_21 = arith.constant 0 : index
    %c0_22 = arith.constant 0 : index
    %c896 = arith.constant 896 : index
    %25 = vector.load %arg6[%c0_21, %c0_22, %c896] : memref<8x16x1152xf32, #tpu.memory_space<vmem>>, vector<8x16x128xf32>
    tpu.vector_store %arg6[%c0_21, %c0_22, %c896], %24 {strides = array<i32>} : memref<8x16x1152xf32, #tpu.memory_space<vmem>>, vector<8x16x128xf32>,
    %26 = vector.extract_strided_slice %9 {offsets = [2, 2, 0], sizes = [8, 16, 128], strides = [1, 1, 1]} : vector<10x24x128xf32> to vector<8x16x128xf32>
    %c0_23 = arith.constant 0 : index
    %c0_24 = arith.constant 0 : index
    %c1024 = arith.constant 1024 : index
    %27 = vector.load %arg6[%c0_23, %c0_24, %c1024] : memref<8x16x1152xf32, #tpu.memory_space<vmem>>, vector<8x16x128xf32>
    tpu.vector_store %arg6[%c0_23, %c0_24, %c1024], %26 {strides = array<i32>} : memref<8x16x1152xf32, #tpu.memory_space<vmem>>, vector<8x16x128xf32>,
    %c0_25 = arith.constant 0 : index
    %c0_26 = arith.constant 0 : index
    %c0_27 = arith.constant 0 : index
    %28 = vector.load %arg6[%c0_25, %c0_26, %c0_27] : memref<8x16x1152xf32, #tpu.memory_space<vmem>>, vector<8x16x1152xf32>
    %29 = vector.shape_cast %28 : vector<8x16x1152xf32> to vector<128x1152xf32>
    %c0_28 = arith.constant 0 : index
    %c0_29 = arith.constant 0 : index
    %30 = vector.load %arg4[%c0_28, %c0_29] : memref<1152x128xf32, #tpu.memory_space<vmem>>, vector<1152x128xf32>
    %cst_30 = arith.constant dense<0.000000e+00> : vector<128x128xf32>
    %31 = tpu.matmul %29, %30, %cst_30 {dimension_numbers = #tpu.dot_dimension_numbers<[1], [0], [0], [1], [0, 0, 1, 1], [], []>} : vector<128x1152xf32>, vector<1152x128xf32>, vector<128x128xf32> -> vector<128x128xf32>
    %32 = arith.mulf %31, %31 : vector<128x128xf32>
    %cst_31 = arith.constant dense<0.000000e+00> : vector<128xf32>
    %33 = vector.multi_reduction <add>, %32, %cst_31 [0] : vector<128x128xf32> to vector<128xf32>
    %34 = vector.shape_cast %33 : vector<128xf32> to vector<1x128xf32>
    %35 = vector.shape_cast %34 : vector<1x128xf32> to vector<1x1x128xf32>
    %c0_32 = arith.constant 0 : index
    %c0_33 = arith.constant 0 : index
    %c0_34 = arith.constant 0 : index
    %36 = vector.load %arg5[%c0_32, %c0_33, %c0_34] : memref<1x1x128xf32, #tpu.memory_space<vmem>>, vector<1x1x128xf32>
    tpu.vector_store %arg5[%c0_32, %c0_33, %c0_34], %35 {strides = array<i32>} : memref<1x1x128xf32, #tpu.memory_space<vmem>>, vector<1x1x128xf32>,
    return
  }
  func.func @transform_0(%arg0: i32, %arg1: i32) -> (i32, i32, i32, i32) {
    %c0_i32 = arith.constant 0 : i32
    %c0_i32_0 = arith.constant 0 : i32
    %c0_i32_1 = arith.constant 0 : i32
    return %arg0, %arg1, %c0_i32, %c0_i32_0 : i32, i32, i32, i32
  }
  func.func @transform_1(%arg0: i32, %arg1: i32) -> (i32, i32) {
    %c0_i32 = arith.constant 0 : i32
    %c0_i32_0 = arith.constant 0 : i32
    %c0_i32_1 = arith.constant 0 : i32
    return %c0_i32, %c0_i32_0 : i32, i32
  }
  func.func @transform_2(%arg0: i32, %arg1: i32) -> (i32, i32) {
    %c0_i32 = arith.constant 0 : i32
    %c0_i32_0 = arith.constant 0 : i32
    %c0_i32_1 = arith.constant 0 : i32
    return %c0_i32, %c0_i32_0 : i32, i32
  }
  func.func @transform_3(%arg0: i32, %arg1: i32) -> (i32, i32, i32) {
    %c2_i32 = arith.constant 2 : i32
    %0 = arith.muli %arg0, %c2_i32 : i32
    %1 = arith.addi %0, %arg1 : i32
    %c0_i32 = arith.constant 0 : i32
    %c0_i32_0 = arith.constant 0 : i32
    %c0_i32_1 = arith.constant 0 : i32
    return %1, %c0_i32, %c0_i32_0 : i32, i32, i32
  }
}

</mosaic_0001>

<llo_original>
// kernel: feat_loss.1
$region0: #{feat_loss.1}
  #allocation0 [shape = 'u32[]', space=smem, size = 0x4, offset = 0x4, fixed_abs, tag = 'smem constant byte address 0x4 - core index']
  #allocation1 [shape = 'u32[144,128]{1,0:T(1,128)}', space=vmem, size = 0x12000, scoped, tag = 'internal scratch']
  #allocation2 [shape = 'f32[8,16,1152]{2,1,0:T(8,128)}', space=vmem, size = 0x90000, scoped, tag = 'scratch operand']
  %s0 = inlined_call_operand.vmem [shape: bf16[2,2,480,128], index: 0, kind: input, shape index: {}]
  %s1 = inlined_call_operand.vmem [shape: bf16[128,128], index: 1, kind: input, shape index: {}]
  %s2 = inlined_call_operand.vmem [shape: f32[1152,128], index: 2, kind: input, shape index: {}]
  %s3 = inlined_call_operand.vmem [shape: f32[4,1,128], index: 3, kind: output, shape index: {}]
  %s4 = sld [smem:[#allocation0]]
  $region45: #{feat_loss.1} parent=0
    _
  %s6 = ssub.s32 1, %s4
  %s7 = scalar_select 0, %s6, %s4
  loop: start=0, step=1, limit=6
  $region2: #{feat_loss.1} parent=0 // loop_pre_header
    _
  $region3: #{feat_loss.1} parent=0 // loop_header
    %s9 = sphi 0, %s13
    %p10 = scmp.ge.s32.totalorder %s9, 6
    %s16 = sphi 0, %s28
    %s17 = sphi 0, %s24
    %s18 = sphi 0, %s16
    %s19 = sphi 0, %s17
    %s20 = sphi 0, %s18
    %s21 = sphi 0, %s19
    %s33 = sphi 0, %s35
    %s36 = sphi 0, %s33
    %s37 = sphi 0, %s36
    %s53 = sphi 0, %s37
    %s57 = sphi 0, %s57
    %s59 = sphi 0, %s57
    %s60 = sphi 0, %s59
    %s74 = sphi 0, %s60
    %s78 = sphi 0, %s78
    %s80 = sphi 0, %s78
    %s81 = sphi 0, %s80
    %s95 = sphi 0, %s81
    %s105 = sphi 0, %s107
    %s108 = sphi 0, %s105
    %s109 = sphi 0, %s108
    %s125 = sphi 0, %s109
  $region4: #{feat_loss.1} parent=0 // loop_header_branch
    %12 = sbr.rel (%p10) target = $region8
  $region5: #{feat_loss.1} parent=0 // loop_body
    %s14 = ssub.s32 %s9, 1
    %s15 = ssub.s32 %s9, 2
    %s22 = sadd.s32 1, %s17
    %p23 = scmp.ge.s32.totalorder %s22, 2
    %s24 = scalar_select %p23, 0, %s22
    %s25 = sadd.s32 1, %s16
    %s26 = scalar_select %p23, %s25, %s16
    %p27 = scmp.ge.s32.totalorder %s26, 2
    %s28 = scalar_select %p27, 0, %s26
    %s29 = ssub.s32 %s16, %s28
    %s30 = ssub.s32 %s17, %s24
    %s31 = sor.u32 %s29, %s30
    %p32 = scmp.eq.s32.totalorder %s31, 0
    %s34 = sadd.s32 %s33, 1
    %s35 = scalar_select %p32, %s33, %s34
    %p38 = pneg %p32
    %p39 = scmp.eq.s32.totalorder %s9, 3
    %p40 = por %p38, %p39
    %p41 = scmp.ne.s32.totalorder %s33, %s36
    %p42 = scmp.eq.s32.totalorder %s9, 0
    %p43 = por %p41, %p42
    %p44 = scmp.ne.s32.totalorder %s33, %s36
    %p45 = scmp.eq.s32.totalorder %s14, 3
    %p46 = por %p44, %p45
    %p47 = scmp.ne.s32.totalorder %s36, %s37
    %p48 = scmp.eq.s32.totalorder %s14, 0
    %p49 = por %p47, %p48
    %p50 = scmp.ne.s32.totalorder %s36, %s37
    %p51 = scmp.eq.s32.totalorder %s15, 3
    %p52 = por %p50, %p51
    %p54 = scmp.ne.s32.totalorder %s37, %s53
    %p55 = scmp.eq.s32.totalorder %s15, 0
    %p56 = por %p54, %p55
    %s58 = sadd.s32 %s57, 1
    %p61 = scmp.eq.s32.totalorder %s9, 3
    %p62 = scmp.ne.s32.totalorder %s57, %s59
    %p63 = scmp.eq.s32.totalorder %s9, 0
    %p64 = por %p62, %p63
    %p65 = scmp.ne.s32.totalorder %s57, %s59
    %p66 = scmp.eq.s32.totalorder %s14, 3
    %p67 = por %p65, %p66
    %p68 = scmp.ne.s32.totalorder %s59, %s60
    %p69 = scmp.eq.s32.totalorder %s14, 0
    %p70 = por %p68, %p69
    %p71 = scmp.ne.s32.totalorder %s59, %s60
    %p72 = scmp.eq.s32.totalorder %s15, 3
    %p73 = por %p71, %p72
    %p75 = scmp.ne.s32.totalorder %s60, %s74
    %p76 = scmp.eq.s32.totalorder %s15, 0
    %p77 = por %p75, %p76
    %s79 = sadd.s32 %s78, 1
    %p82 = scmp.eq.s32.totalorder %s9, 3
    %p83 = scmp.ne.s32.totalorder %s78, %s80
    %p84 = scmp.eq.s32.totalorder %s9, 0
    %p85 = por %p83, %p84
    %p86 = scmp.ne.s32.totalorder %s78, %s80
    %p87 = scmp.eq.s32.totalorder %s14, 3
    %p88 = por %p86, %p87
    %p89 = scmp.ne.s32.totalorder %s80, %s81
    %p90 = scmp.eq.s32.totalorder %s14, 0
    %p91 = por %p89, %p90
    %p92 = scmp.ne.s32.totalorder %s80, %s81
    %p93 = scmp.eq.s32.totalorder %s15, 3
    %p94 = por %p92, %p93
    %p96 = scmp.ne.s32.totalorder %s81, %s95
    %p97 = scmp.eq.s32.totalorder %s15, 0
    %p98 = por %p96, %p97
    %s99 = smul.u32 %s16, 2
    %s100 = sadd.s32 %s99, %s17
    %s101 = smul.u32 %s28, 2
    %s102 = sadd.s32 %s101, %s24
    %s103 = ssub.s32 %s100, %s102
    %p104 = scmp.eq.s32.totalorder %s103, 0
    %s106 = sadd.s32 %s105, 1
    %s107 = scalar_select %p104, %s105, %s106
    %p110 = pneg %p104
    %p111 = scmp.eq.s32.totalorder %s9, 3
    %p112 = por %p110, %p111
    %p113 = scmp.ne.s32.totalorder %s105, %s108
    %p114 = scmp.eq.s32.totalorder %s9, 0
    %p115 = por %p113, %p114
    %p116 = scmp.ne.s32.totalorder %s105, %s108
    %p117 = scmp.eq.s32.totalorder %s14, 3
    %p118 = por %p116, %p117
    %p119 = scmp.ne.s32.totalorder %s108, %s109
    %p120 = scmp.eq.s32.totalorder %s14, 0
    %p121 = por %p119, %p120
    %p122 = scmp.ne.s32.totalorder %s108, %s109
    %p123 = scmp.eq.s32.totalorder %s15, 3
    %p124 = por %p122, %p123
    %p126 = scmp.ne.s32.totalorder %s109, %s125
    %p127 = scmp.eq.s32.totalorder %s15, 0
    %p128 = por %p126, %p127
    %p129 = scmp.le.s32.totalorder 1, %s9
    %p130 = scmp.lt.s32.totalorder %s9, 5
    %p131 = pnand %p129, %p130
    %p132 = pneg %p131
    // Predicated region
    $region9: #{feat_loss.1} parent=5 // pred_check
      _
    $region10: #{feat_loss.1} parent=5 // pred_check_branch
      %134 = sbr.rel (%p131) target = $region12
    $region11: #{feat_loss.1} parent=5 // pred_region
      %s135 = ssub.s32 %s9, 1
      // Predicated region
      $region13: #{feat_loss.1} parent=11 // pred_check
        %p136 = pneg %p70
      $region14: #{feat_loss.1} parent=11 // pred_check_branch
        %138 = sbr.rel (%p136) target = $region16
      $region15: #{feat_loss.1} parent=11 // pred_region
        _
      $region16: #{feat_loss.1} parent=11 // pred_fallthru
        _
      // Predicated region
      $region17: #{feat_loss.1} parent=11 // pred_check
        %p139 = pneg %p91
      $region18: #{feat_loss.1} parent=11 // pred_check_branch
        %141 = sbr.rel (%p139) target = $region20
      $region19: #{feat_loss.1} parent=11 // pred_region
        _
      $region20: #{feat_loss.1} parent=11 // pred_fallthru
        _
    $region12: #{feat_loss.1} parent=5 // pred_fallthru
      _
    %p142 = scmp.lt.s32.totalorder %s9, 4
    // Predicated region
    $region21: #{feat_loss.1} parent=5 // pred_check
      %p143 = pneg %p142
    $region22: #{feat_loss.1} parent=5 // pred_check_branch
      %145 = sbr.rel (%p143) target = $region24
    $region23: #{feat_loss.1} parent=5 // pred_region
      // Predicated region
      $region25: #{feat_loss.1} parent=23 // pred_check
        %p146 = pneg %p43
      $region26: #{feat_loss.1} parent=23 // pred_check_branch
        %148 = sbr.rel (%p146) target = $region28
      $region27: #{feat_loss.1} parent=23 // pred_region
        %p149 = scmp.lt.s32.totalorder %s16, 1
        %s150 = scalar_select %p149, %s16, 1
        %p151 = scmp.lt.s32.totalorder %s17, 1
        %s152 = scalar_select %p151, %s17, 1
        %s153 = smul.addr %s152, 60
        %s154 = smul.addr %s150, 120
        %s155 = sadd.s32 %s153, %s154
        %s156 = smul.addr %s155, 4
        %s157 = scalar_lea.vmem %s0, %s156
      $region28: #{feat_loss.1} parent=23 // pred_fallthru
        _
    $region24: #{feat_loss.1} parent=5 // pred_fallthru
      _
    %p158 = scmp.le.s32.totalorder 1, %s9
    %p159 = scmp.lt.s32.totalorder %s9, 5
    %p160 = pnand %p158, %p159
    %p161 = pneg %p160
    // Predicated region
    $region29: #{feat_loss.1} parent=5 // pred_check
      _
    $region30: #{feat_loss.1} parent=5 // pred_check_branch
      %163 = sbr.rel (%p160) target = $region32
    $region31: #{feat_loss.1} parent=5 // pred_region
      %s164 = ssub.s32 %s9, 1
      %p165 = scmp.lt.s32.totalorder %s18, 1
      %s166 = scalar_select %p165, %s18, 1
      %p167 = scmp.lt.s32.totalorder %s19, 1
      %s168 = scalar_select %p167, %s19, 1
      %s169 = smul.addr %s168, 60
      %s170 = smul.addr %s166, 120
      %s171 = sadd.s32 %s169, %s170
      %s172 = smul.addr %s171, 4
      %s173 = scalar_lea.vmem %s0, %s172
      %p174 = pneg %p49
      %p175 = pneg %p46
      %p176 = pneg %p70
      %p177 = pneg %p67
      %p178 = pneg %p91
      %p179 = pneg %p88
      %p180 = pneg %p121
      %p181 = pneg %p118
      %s182 = smul.u32 %s18, 2
      %s183 = sadd.s32 %s182, %s19
      %p184 = scmp.lt.s32.totalorder %s183, 3
      %s185 = scalar_select %p184, %s183, 3
      %s186 = scalar_lea.vmem %s3, %s185
      %p187 = scmp.lt.s32.totalorder %s18, 1
      %s188 = scalar_select %p187, %s18, 1
      %p189 = scmp.lt.s32.totalorder %s19, 1
      %s190 = scalar_select %p189, %s19, 1
      %s191 = smul.addr %s190, 60
      %s192 = smul.addr %s188, 120
      %s193 = sadd.s32 %s191, %s192
      %s194 = smul.addr %s193, 4
      %s195 = scalar_lea.vmem %s0, %s194
      %s196 = smul.u32 %s18, 2
      %s197 = sadd.s32 %s196, %s19
      %p198 = scmp.lt.s32.totalorder %s197, 3
      %s199 = scalar_select %p198, %s197, 3
      %s200 = scalar_lea.vmem %s3, %s199
      %s201 = smul.u32 %s18, 2
      %s202 = sadd.s32 %s201, %s19
      %v204 = vld [vmem:[%s195] sm:$0xf]
      %v205 = vld [vmem:[%s195 + $0x4] sm:$0xf]
      %v206 = vld [vmem:[%s195 + $0x8] sm:$0xf]
      %v207 = vld [vmem:[%s195 + $0xc] sm:$0xf]
      %v208 = vld [vmem:[%s195 + $0x10] sm:$0xf]
      %v209 = vld [vmem:[%s195 + $0x14] sm:$0xf]
      %v210 = vld [vmem:[%s195 + $0x18] sm:$0xf]
      %v211 = vld [vmem:[%s195 + $0x1c] sm:$0xf]
      %v212 = vld [vmem:[%s195 + $0x20] sm:$0xf]
      %v213 = vld [vmem:[%s195 + $0x24] sm:$0xf]
      %v214 = vld [vmem:[%s195 + $0x28] sm:$0xf]
      %v215 = vld [vmem:[%s195 + $0x2c] sm:$0xf]
      %v216 = vld [vmem:[%s195 + $0x30] sm:$0xf]
      %v217 = vld [vmem:[%s195 + $0x34] sm:$0xf]
      %v218 = vld [vmem:[%s195 + $0x38] sm:$0xf]
      %v219 = vld [vmem:[%s195 + $0x3c] sm:$0xf]
      %v220 = vld [vmem:[%s195 + $0x40] sm:$0xf]
      %v221 = vld [vmem:[%s195 + $0x44] sm:$0xf]
      %v222 = vld [vmem:[%s195 + $0x48] sm:$0xf]
      %v223 = vld [vmem:[%s195 + $0x4c] sm:$0xf]
      %v224 = vld [vmem:[%s195 + $0x50] sm:$0xf]
      %v225 = vld [vmem:[%s195 + $0x54] sm:$0xf]
      %v226 = vld [vmem:[%s195 + $0x58] sm:$0xf]
      %v227 = vld [vmem:[%s195 + $0x5c] sm:$0xf]
      %v228 = vld [vmem:[%s195 + $0x60] sm:$0xf]
      %v229 = vld [vmem:[%s195 + $0x64] sm:$0xf]
      %v230 = vld [vmem:[%s195 + $0x68] sm:$0xf]
      %v231 = vld [vmem:[%s195 + $0x6c] sm:$0xf]
      %v232 = vld [vmem:[%s195 + $0x70] sm:$0xf]
      %v233 = vld [vmem:[%s195 + $0x74] sm:$0xf]
      %v234 = vld [vmem:[%s195 + $0x78] sm:$0xf]
      %v235 = vld [vmem:[%s195 + $0x7c] sm:$0xf]
      %v236 = vld [vmem:[%s195 + $0x80] sm:$0xf]
      %v237 = vld [vmem:[%s195 + $0x84] sm:$0xf]
      %v238 = vld [vmem:[%s195 + $0x88] sm:$0xf]
      %v239 = vld [vmem:[%s195 + $0x8c] sm:$0xf]
      %v240 = vld [vmem:[%s195 + $0x90] sm:$0xf]
      %v241 = vld [vmem:[%s195 + $0x94] sm:$0xf]
      %v242 = vld [vmem:[%s195 + $0x98] sm:$0xf]
      %v243 = vld [vmem:[%s195 + $0x9c] sm:$0xf]
      %v244 = vld [vmem:[%s195 + $0xa0] sm:$0xf]
      %v245 = vld [vmem:[%s195 + $0xa4] sm:$0xf]
      %v246 = vld [vmem:[%s195 + $0xa8] sm:$0xf]
      %v247 = vld [vmem:[%s195 + $0xac] sm:$0xf]
      %v248 = vld [vmem:[%s195 + $0xb0] sm:$0xf]
      %v249 = vld [vmem:[%s195 + $0xb4] sm:$0xf]
      %v250 = vld [vmem:[%s195 + $0xb8] sm:$0xf]
      %v251 = vld [vmem:[%s195 + $0xbc] sm:$0xf]
      %v252 = vld [vmem:[%s195 + $0xc0] sm:$0xf]
      %v253 = vld [vmem:[%s195 + $0xc4] sm:$0xf]
      %v254 = vld [vmem:[%s195 + $0xc8] sm:$0xf]
      %v255 = vld [vmem:[%s195 + $0xcc] sm:$0xf]
      %v256 = vld [vmem:[%s195 + $0xd0] sm:$0xf]
      %v257 = vld [vmem:[%s195 + $0xd4] sm:$0xf]
      %v258 = vld [vmem:[%s195 + $0xd8] sm:$0xf]
      %v259 = vld [vmem:[%s195 + $0xdc] sm:$0xf]
      %v260 = vld [vmem:[%s195 + $0xe0] sm:$0xf]
      %v261 = vld [vmem:[%s195 + $0xe4] sm:$0xf]
      %v262 = vld [vmem:[%s195 + $0xe8] sm:$0xf]
      %v263 = vld [vmem:[%s195 + $0xec] sm:$0xf]
      %v264 = vld [vmem:[%s1] sm:$0xf]
      %v265 = vld [vmem:[%s1 + $0x4] sm:$0xf]
      %v266 = vld [vmem:[%s1 + $0x8] sm:$0xf]
      %v267 = vld [vmem:[%s1 + $0xc] sm:$0xf]
      %v268 = vld [vmem:[%s1 + $0x10] sm:$0xf]
      %v269 = vld [vmem:[%s1 + $0x14] sm:$0xf]
      %v270 = vld [vmem:[%s1 + $0x18] sm:$0xf]
      %v271 = vld [vmem:[%s1 + $0x1c] sm:$0xf]
      %v272 = vld [vmem:[%s1 + $0x20] sm:$0xf]
      %v273 = vld [vmem:[%s1 + $0x24] sm:$0xf]
      %v274 = vld [vmem:[%s1 + $0x28] sm:$0xf]
      %v275 = vld [vmem:[%s1 + $0x2c] sm:$0xf]
      %v276 = vld [vmem:[%s1 + $0x30] sm:$0xf]
      %v277 = vld [vmem:[%s1 + $0x34] sm:$0xf]
      %v278 = vld [vmem:[%s1 + $0x38] sm:$0xf]
      %v279 = vld [vmem:[%s1 + $0x3c] sm:$0xf]
      %v340 = vunpack.c.l.b16 %v204
      %v341 = vunpack.c.l.b16 %v205
      %v342 = vunpack.c.l.b16 %v206
      %v343 = vunpack.c.l.b16 %v207
      %v344 = vunpack.c.l.b16 %v208
      %v345 = vunpack.c.l.b16 %v209
      %v346 = vunpack.c.l.b16 %v210
      %v347 = vunpack.c.l.b16 %v211
      %v348 = vunpack.c.l.b16 %v212
      %v349 = vunpack.c.l.b16 %v213
      %v350 = vunpack.c.l.b16 %v214
      %v351 = vunpack.c.l.b16 %v215
      %v352 = vunpack.c.l.b16 %v216
      %v353 = vunpack.c.l.b16 %v217
      %v354 = vunpack.c.l.b16 %v218
      %v355 = vunpack.c.l.b16 %v219
      %v356 = vunpack.c.l.b16 %v220
      %v357 = vunpack.c.l.b16 %v221
      %v358 = vunpack.c.l.b16 %v222
      %v359 = vunpack.c.l.b16 %v223
      %v360 = vunpack.c.l.b16 %v224
      %v361 = vunpack.c.l.b16 %v225
      %v362 = vunpack.c.l.b16 %v226
      %v363 = vunpack.c.l.b16 %v227
      %v364 = vunpack.c.l.b16 %v228
      %v365 = vunpack.c.l.b16 %v229
      %v366 = vunpack.c.l.b16 %v230
      %v367 = vunpack.c.l.b16 %v231
      %v368 = vunpack.c.l.b16 %v232
      %v369 = vunpack.c.l.b16 %v233
      %v370 = vunpack.c.l.b16 %v234
      %v371 = vunpack.c.l.b16 %v235
      %v372 = vunpack.c.l.b16 %v236
      %v373 = vunpack.c.l.b16 %v237
      %v374 = vunpack.c.l.b16 %v238
      %v375 = vunpack.c.l.b16 %v239
      %v376 = vunpack.c.l.b16 %v240
      %v377 = vunpack.c.l.b16 %v241
      %v378 = vunpack.c.l.b16 %v242
      %v379 = vunpack.c.l.b16 %v243
      %v380 = vunpack.c.l.b16 %v244
      %v381 = vunpack.c.l.b16 %v245
      %v382 = vunpack.c.l.b16 %v246
      %v383 = vunpack.c.l.b16 %v247
      %v384 = vunpack.c.l.b16 %v248
      %v385 = vunpack.c.l.b16 %v249
      %v386 = vunpack.c.l.b16 %v250
      %v387 = vunpack.c.l.b16 %v251
      %v388 = vunpack.c.l.b16 %v252
      %v389 = vunpack.c.l.b16 %v253
      %v390 = vunpack.c.l.b16 %v254
      %v391 = vunpack.c.l.b16 %v255
      %v392 = vunpack.c.l.b16 %v256
      %v393 = vunpack.c.l.b16 %v257
      %v394 = vunpack.c.l.b16 %v258
      %v395 = vunpack.c.l.b16 %v259
      %v396 = vunpack.c.l.b16 %v260
      %v397 = vunpack.c.l.b16 %v261
      %v398 = vunpack.c.l.b16 %v262
      %v399 = vunpack.c.l.b16 %v263
      %v400 = vpack.c.b16 %v341, %v340
      %v401 = vpack.c.b16 %v343, %v342
      %v402 = vpack.c.b16 %v345, %v344
      %v403 = vpack.c.b16 %v347, %v346
      %v404 = vpack.c.b16 %v349, %v348
      %v405 = vpack.c.b16 %v351, %v350
      %v406 = vpack.c.b16 %v353, %v352
      %v407 = vpack.c.b16 %v355, %v354
      %v408 = vpack.c.b16 %v357, %v356
      %v409 = vpack.c.b16 %v359, %v358
      %v410 = vpack.c.b16 %v361, %v360
      %v411 = vpack.c.b16 %v363, %v362
      %v412 = vpack.c.b16 %v365, %v364
      %v413 = vpack.c.b16 %v367, %v366
      %v414 = vpack.c.b16 %v369, %v368
      %v415 = vpack.c.b16 %v371, %v370
      %v416 = vpack.c.b16 %v373, %v372
      %v417 = vpack.c.b16 %v375, %v374
      %v418 = vpack.c.b16 %v377, %v376
      %v419 = vpack.c.b16 %v379, %v378
      %v420 = vpack.c.b16 %v381, %v380
      %v421 = vpack.c.b16 %v383, %v382
      %v422 = vpack.c.b16 %v385, %v384
      %v423 = vpack.c.b16 %v387, %v386
      %v424 = vpack.c.b16 %v389, %v388
      %v425 = vpack.c.b16 %v391, %v390
      %v426 = vpack.c.b16 %v393, %v392
      %v427 = vpack.c.b16 %v395, %v394
      %v428 = vpack.c.b16 %v397, %v396
      %v429 = vpack.c.b16 %v399, %v398
      %v476 = vunpack.c.l.b16 %v264
      %v477 = vunpack.c.l.b16 %v265
      %v478 = vunpack.c.l.b16 %v266
      %v479 = vunpack.c.l.b16 %v267
      %v480 = vunpack.c.l.b16 %v268
      %v481 = vunpack.c.l.b16 %v269
      %v482 = vunpack.c.l.b16 %v270
      %v483 = vunpack.c.l.b16 %v271
      %v484 = vunpack.c.l.b16 %v272
      %v485 = vunpack.c.l.b16 %v273
      %v486 = vunpack.c.l.b16 %v274
      %v487 = vunpack.c.l.b16 %v275
      %v488 = vunpack.c.l.b16 %v276
      %v489 = vunpack.c.l.b16 %v277
      %v490 = vunpack.c.l.b16 %v278
      %v491 = vunpack.c.l.b16 %v279
      %v492 = vpack.c.b16 %v477, %v476
      %v493 = vpack.c.b16 %v479, %v478
      %v494 = vpack.c.b16 %v481, %v480
      %v495 = vpack.c.b16 %v483, %v482
      %v496 = vpack.c.b16 %v485, %v484
      %v497 = vpack.c.b16 %v487, %v486
      %v498 = vpack.c.b16 %v489, %v488
      %v499 = vpack.c.b16 %v491, %v490
      %508 = vmatprep.subr.bf16.mxu0 0
      %509 = vmatpush1.bf16.msra.mxu0 %v499
      %510 = vmatprep.subr.bf16.mxu0 0
      %511 = vmatpush1.bf16.msra.mxu0 %v498
      %512 = vmatprep.subr.bf16.mxu0 0
      %513 = vmatpush1.bf16.msra.mxu0 %v497
      %514 = vmatprep.subr.bf16.mxu0 0
      %515 = vmatpush1.bf16.msra.mxu0 %v496
      %516 = vmatprep.subr.bf16.mxu0 0
      %517 = vmatpush1.bf16.msra.mxu0 %v495
      %518 = vmatprep.subr.bf16.mxu0 0
      %519 = vmatpush1.bf16.msra.mxu0 %v494
      %520 = vmatprep.subr.bf16.mxu0 0
      %521 = vmatpush1.bf16.msra.mxu0 %v493
      %522 = vmatprep.subr.bf16.mxu0 0
      %523 = vmatpush1.bf16.msra.mxu0 %v492
      %524 = vmatprep.subr.bf16.mxu0 0
      %525 = vmatpush2.bf16.msra.mxu0 0
      %526 = vmatprep.subr.bf16.mxu0 0
      %527 = vmatpush2.bf16.msra.mxu0 0
      %528 = vmatprep.subr.bf16.mxu0 0
      %529 = vmatpush2.bf16.msra.mxu0 0
      %530 = vmatprep.subr.bf16.mxu0 0
      %531 = vmatpush2.bf16.msra.mxu0 0
      %532 = vmatprep.subr.bf16.mxu0 0
      %533 = vmatpush2.bf16.msra.mxu0 0
      %534 = vmatprep.subr.bf16.mxu0 0
      %535 = vmatpush2.bf16.msra.mxu0 0
      %536 = vmatprep.subr.bf16.mxu0 0
      %537 = vmatpush2.bf16.msra.mxu0 0
      %538 = vmatprep.subr.bf16.mxu0 0
      %539 = vmatpush2.bf16.msra.mxu0 0
      %540 = vmatprep.mubr.bf16.mxu0 0
      %541 = vmatmul.mubr.bf16.gmra.mxu0 %v400
      %v542 = vpop.f32.mrf.mxu0
      %v543 = vadd.f32 0.0, %v542
      %v544 = vpop.f32.mrf.mxu0
      %v545 = vpop.f32.mrf.mxu0
      %v546 = vadd.f32 0.0, %v545
      %v547 = vpop.f32.mrf.mxu0
      %548 = vmatprep.mubr.bf16.mxu0 0
      %549 = vmatmul.mubr.bf16.gmra.mxu0 %v401
      %v550 = vpop.f32.mrf.mxu0
      %v551 = vadd.f32 0.0, %v550
      %v552 = vpop.f32.mrf.mxu0
      %v553 = vpop.f32.mrf.mxu0
      %v554 = vadd.f32 0.0, %v553
      %v555 = vpop.f32.mrf.mxu0
      %556 = vmatprep.mubr.bf16.mxu0 0
      %557 = vmatmul.mubr.bf16.gmra.mxu0 %v402
      %v558 = vpop.f32.mrf.mxu0
      %v559 = vadd.f32 0.0, %v558
      %v560 = vpop.f32.mrf.mxu0
      %v561 = vpop.f32.mrf.mxu0
      %v562 = vadd.f32 0.0, %v561
      %v563 = vpop.f32.mrf.mxu0
      %564 = vmatprep.mubr.bf16.mxu0 0
      %565 = vmatmul.mubr.bf16.gmra.mxu0 %v403
      %v566 = vpop.f32.mrf.mxu0
      %v567 = vadd.f32 0.0, %v566
      %v568 = vpop.f32.mrf.mxu0
      %v569 = vpop.f32.mrf.mxu0
      %v570 = vadd.f32 0.0, %v569
      %v571 = vpop.f32.mrf.mxu0
      %572 = vmatprep.mubr.bf16.mxu0 0
      %573 = vmatmul.mubr.bf16.gmra.mxu0 %v404
      %v574 = vpop.f32.mrf.mxu0
      %v575 = vadd.f32 0.0, %v574
      %v576 = vpop.f32.mrf.mxu0
      %v577 = vpop.f32.mrf.mxu0
      %v578 = vadd.f32 0.0, %v577
      %v579 = vpop.f32.mrf.mxu0
      %580 = vmatprep.mubr.bf16.mxu0 0
      %581 = vmatmul.mubr.bf16.gmra.mxu0 %v405
      %v582 = vpop.f32.mrf.mxu0
      %v583 = vadd.f32 0.0, %v582
      %v584 = vpop.f32.mrf.mxu0
      %v585 = vpop.f32.mrf.mxu0
      %v586 = vadd.f32 0.0, %v585
      %v587 = vpop.f32.mrf.mxu0
      %588 = vmatprep.mubr.bf16.mxu0 0
      %589 = vmatmul.mubr.bf16.gmra.mxu0 %v406
      %v590 = vpop.f32.mrf.mxu0
      %v591 = vadd.f32 0.0, %v590
      %v592 = vpop.f32.mrf.mxu0
      %v593 = vpop.f32.mrf.mxu0
      %v594 = vadd.f32 0.0, %v593
      %v595 = vpop.f32.mrf.mxu0
      %596 = vmatprep.mubr.bf16.mxu0 0
      %597 = vmatmul.mubr.bf16.gmra.mxu0 %v407
      %v598 = vpop.f32.mrf.mxu0
      %v599 = vadd.f32 0.0, %v598
      %v600 = vpop.f32.mrf.mxu0
      %v601 = vpop.f32.mrf.mxu0
      %v602 = vadd.f32 0.0, %v601
      %v603 = vpop.f32.mrf.mxu0
      %604 = vmatprep.mubr.bf16.mxu0 0
      %605 = vmatmul.mubr.bf16.gmra.mxu0 %v408
      %v606 = vpop.f32.mrf.mxu0
      %v607 = vadd.f32 0.0, %v606
      %v608 = vpop.f32.mrf.mxu0
      %v609 = vpop.f32.mrf.mxu0
      %v610 = vadd.f32 0.0, %v609
      %v611 = vpop.f32.mrf.mxu0
      %612 = vmatprep.mubr.bf16.mxu0 0
      %613 = vmatmul.mubr.bf16.gmra.mxu0 %v409
      %v614 = vpop.f32.mrf.mxu0
      %v615 = vadd.f32 0.0, %v614
      %v616 = vpop.f32.mrf.mxu0
      %v617 = vpop.f32.mrf.mxu0
      %v618 = vadd.f32 0.0, %v617
      %v619 = vpop.f32.mrf.mxu0
      %620 = vmatprep.mubr.bf16.mxu0 0
      %621 = vmatmul.mubr.bf16.gmra.mxu0 %v410
      %v622 = vpop.f32.mrf.mxu0
      %v623 = vadd.f32 0.0, %v622
      %v624 = vpop.f32.mrf.mxu0
      %v625 = vpop.f32.mrf.mxu0
      %v626 = vadd.f32 0.0, %v625
      %v627 = vpop.f32.mrf.mxu0
      %628 = vmatprep.mubr.bf16.mxu0 0
      %629 = vmatmul.mubr.bf16.gmra.mxu0 %v411
      %v630 = vpop.f32.mrf.mxu0
      %v631 = vadd.f32 0.0, %v630
      %v632 = vpop.f32.mrf.mxu0
      %v633 = vpop.f32.mrf.mxu0
      %v634 = vadd.f32 0.0, %v633
      %v635 = vpop.f32.mrf.mxu0
      %636 = vmatprep.mubr.bf16.mxu0 0
      %637 = vmatmul.mubr.bf16.gmra.mxu0 %v412
      %v638 = vpop.f32.mrf.mxu0
      %v639 = vadd.f32 0.0, %v638
      %v640 = vpop.f32.mrf.mxu0
      %v641 = vpop.f32.mrf.mxu0
      %v642 = vadd.f32 0.0, %v641
      %v643 = vpop.f32.mrf.mxu0
      %644 = vmatprep.mubr.bf16.mxu0 0
      %645 = vmatmul.mubr.bf16.gmra.mxu0 %v413
      %v646 = vpop.f32.mrf.mxu0
      %v647 = vadd.f32 0.0, %v646
      %v648 = vpop.f32.mrf.mxu0
      %v649 = vpop.f32.mrf.mxu0
      %v650 = vadd.f32 0.0, %v649
      %v651 = vpop.f32.mrf.mxu0
      %652 = vmatprep.mubr.bf16.mxu0 0
      %653 = vmatmul.mubr.bf16.gmra.mxu0 %v414
      %v654 = vpop.f32.mrf.mxu0
      %v655 = vadd.f32 0.0, %v654
      %v656 = vpop.f32.mrf.mxu0
      %v657 = vpop.f32.mrf.mxu0
      %v658 = vadd.f32 0.0, %v657
      %v659 = vpop.f32.mrf.mxu0
      %660 = vmatprep.mubr.bf16.mxu0 0
      %661 = vmatmul.mubr.bf16.gmra.mxu0 %v415
      %v662 = vpop.f32.mrf.mxu0
      %v663 = vadd.f32 0.0, %v662
      %v664 = vpop.f32.mrf.mxu0
      %v665 = vpop.f32.mrf.mxu0
      %v666 = vadd.f32 0.0, %v665
      %v667 = vpop.f32.mrf.mxu0
      %668 = vmatprep.mubr.bf16.mxu0 0
      %669 = vmatmul.mubr.bf16.gmra.mxu0 %v416
      %v670 = vpop.f32.mrf.mxu0
      %v671 = vadd.f32 0.0, %v670
      %v672 = vpop.f32.mrf.mxu0
      %v673 = vpop.f32.mrf.mxu0
      %v674 = vadd.f32 0.0, %v673
      %v675 = vpop.f32.mrf.mxu0
      %676 = vmatprep.mubr.bf16.mxu0 0
      %677 = vmatmul.mubr.bf16.gmra.mxu0 %v417
      %v678 = vpop.f32.mrf.mxu0
      %v679 = vadd.f32 0.0, %v678
      %v680 = vpop.f32.mrf.mxu0
      %v681 = vpop.f32.mrf.mxu0
      %v682 = vadd.f32 0.0, %v681
      %v683 = vpop.f32.mrf.mxu0
      %684 = vmatprep.mubr.bf16.mxu0 0
      %685 = vmatmul.mubr.bf16.gmra.mxu0 %v418
      %v686 = vpop.f32.mrf.mxu0
      %v687 = vadd.f32 0.0, %v686
      %v688 = vpop.f32.mrf.mxu0
      %v689 = vpop.f32.mrf.mxu0
      %v690 = vadd.f32 0.0, %v689
      %v691 = vpop.f32.mrf.mxu0
      %692 = vmatprep.mubr.bf16.mxu0 0
      %693 = vmatmul.mubr.bf16.gmra.mxu0 %v419
      %v694 = vpop.f32.mrf.mxu0
      %v695 = vadd.f32 0.0, %v694
      %v696 = vpop.f32.mrf.mxu0
      %v697 = vpop.f32.mrf.mxu0
      %v698 = vadd.f32 0.0, %v697
      %v699 = vpop.f32.mrf.mxu0
      %700 = vmatprep.mubr.bf16.mxu0 0
      %701 = vmatmul.mubr.bf16.gmra.mxu0 %v420
      %v702 = vpop.f32.mrf.mxu0
      %v703 = vadd.f32 0.0, %v702
      %v704 = vpop.f32.mrf.mxu0
      %v705 = vpop.f32.mrf.mxu0
      %v706 = vadd.f32 0.0, %v705
      %v707 = vpop.f32.mrf.mxu0
      %708 = vmatprep.mubr.bf16.mxu0 0
      %709 = vmatmul.mubr.bf16.gmra.mxu0 %v421
      %v710 = vpop.f32.mrf.mxu0
      %v711 = vadd.f32 0.0, %v710
      %v712 = vpop.f32.mrf.mxu0
      %v713 = vpop.f32.mrf.mxu0
      %v714 = vadd.f32 0.0, %v713
      %v715 = vpop.f32.mrf.mxu0
      %716 = vmatprep.mubr.bf16.mxu0 0
      %717 = vmatmul.mubr.bf16.gmra.mxu0 %v422
      %v718 = vpop.f32.mrf.mxu0
      %v719 = vadd.f32 0.0, %v718
      %v720 = vpop.f32.mrf.mxu0
      %v721 = vpop.f32.mrf.mxu0
      %v722 = vadd.f32 0.0, %v721
      %v723 = vpop.f32.mrf.mxu0
      %724 = vmatprep.mubr.bf16.mxu0 0
      %725 = vmatmul.mubr.bf16.gmra.mxu0 %v423
      %v726 = vpop.f32.mrf.mxu0
      %v727 = vadd.f32 0.0, %v726
      %v728 = vpop.f32.mrf.mxu0
      %v729 = vpop.f32.mrf.mxu0
      %v730 = vadd.f32 0.0, %v729
      %v731 = vpop.f32.mrf.mxu0
      %732 = vmatprep.mubr.bf16.mxu0 0
      %733 = vmatmul.mubr.bf16.gmra.mxu0 %v424
      %v734 = vpop.f32.mrf.mxu0
      %v735 = vadd.f32 0.0, %v734
      %v736 = vpop.f32.mrf.mxu0
      %v737 = vpop.f32.mrf.mxu0
      %v738 = vadd.f32 0.0, %v737
      %v739 = vpop.f32.mrf.mxu0
      %740 = vmatprep.mubr.bf16.mxu0 0
      %741 = vmatmul.mubr.bf16.gmra.mxu0 %v425
      %v742 = vpop.f32.mrf.mxu0
      %v743 = vadd.f32 0.0, %v742
      %v744 = vpop.f32.mrf.mxu0
      %v745 = vpop.f32.mrf.mxu0
      %v746 = vadd.f32 0.0, %v745
      %v747 = vpop.f32.mrf.mxu0
      %748 = vmatprep.mubr.bf16.mxu0 0
      %749 = vmatmul.mubr.bf16.gmra.mxu0 %v426
      %v750 = vpop.f32.mrf.mxu0
      %v751 = vadd.f32 0.0, %v750
      %v752 = vpop.f32.mrf.mxu0
      %v753 = vpop.f32.mrf.mxu0
      %v754 = vadd.f32 0.0, %v753
      %v755 = vpop.f32.mrf.mxu0
      %756 = vmatprep.mubr.bf16.mxu0 0
      %757 = vmatmul.mubr.bf16.gmra.mxu0 %v427
      %v758 = vpop.f32.mrf.mxu0
      %v759 = vadd.f32 0.0, %v758
      %v760 = vpop.f32.mrf.mxu0
      %v761 = vpop.f32.mrf.mxu0
      %v762 = vadd.f32 0.0, %v761
      %v763 = vpop.f32.mrf.mxu0
      %764 = vmatprep.mubr.bf16.mxu0 0
      %765 = vmatmul.mubr.bf16.gmra.mxu0 %v428
      %v766 = vpop.f32.mrf.mxu0
      %v767 = vadd.f32 0.0, %v766
      %v768 = vpop.f32.mrf.mxu0
      %v769 = vpop.f32.mrf.mxu0
      %v770 = vadd.f32 0.0, %v769
      %v771 = vpop.f32.mrf.mxu0
      %772 = vmatprep.mubr.bf16.mxu0 0
      %773 = vmatmul.mubr.bf16.gmra.mxu0 %v429
      %v774 = vpop.f32.mrf.mxu0
      %v775 = vadd.f32 0.0, %v774
      %v776 = vpop.f32.mrf.mxu0
      %v777 = vpop.f32.mrf.mxu0
      %v778 = vadd.f32 0.0, %v777
      %v779 = vpop.f32.mrf.mxu0
      %780 = vdwg.mxu0
      %v781 = vmax.f32 %v543, 0.0
      %v782 = vmax.f32 %v546, 0.0
      %v783 = vmax.f32 %v551, 0.0
      %v784 = vmax.f32 %v554, 0.0
      %v785 = vmax.f32 %v559, 0.0
      %v786 = vmax.f32 %v562, 0.0
      %v787 = vmax.f32 %v567, 0.0
      %v788 = vmax.f32 %v570, 0.0
      %v789 = vmax.f32 %v575, 0.0
      %v790 = vmax.f32 %v578, 0.0
      %v791 = vmax.f32 %v583, 0.0
      %v792 = vmax.f32 %v586, 0.0
      %v793 = vmax.f32 %v591, 0.0
      %v794 = vmax.f32 %v594, 0.0
      %v795 = vmax.f32 %v599, 0.0
      %v796 = vmax.f32 %v602, 0.0
      %v797 = vmax.f32 %v607, 0.0
      %v798 = vmax.f32 %v610, 0.0
      %v799 = vmax.f32 %v615, 0.0
      %v800 = vmax.f32 %v618, 0.0
      %v801 = vmax.f32 %v623, 0.0
      %v802 = vmax.f32 %v626, 0.0
      %v803 = vmax.f32 %v631, 0.0
      %v804 = vmax.f32 %v634, 0.0
      %v805 = vmax.f32 %v639, 0.0
      %v806 = vmax.f32 %v642, 0.0
      %v807 = vmax.f32 %v647, 0.0
      %v808 = vmax.f32 %v650, 0.0
      %v809 = vmax.f32 %v655, 0.0
      %v810 = vmax.f32 %v658, 0.0
      %v811 = vmax.f32 %v663, 0.0
      %v812 = vmax.f32 %v666, 0.0
      %v813 = vmax.f32 %v671, 0.0
      %v814 = vmax.f32 %v674, 0.0
      %v815 = vmax.f32 %v679, 0.0
      %v816 = vmax.f32 %v682, 0.0
      %v817 = vmax.f32 %v687, 0.0
      %v818 = vmax.f32 %v690, 0.0
      %v819 = vmax.f32 %v695, 0.0
      %v820 = vmax.f32 %v698, 0.0
      %v821 = vmax.f32 %v703, 0.0
      %v822 = vmax.f32 %v706, 0.0
      %v823 = vmax.f32 %v711, 0.0
      %v824 = vmax.f32 %v714, 0.0
      %v825 = vmax.f32 %v719, 0.0
      %v826 = vmax.f32 %v722, 0.0
      %v827 = vmax.f32 %v727, 0.0
      %v828 = vmax.f32 %v730, 0.0
      %v829 = vmax.f32 %v735, 0.0
      %v830 = vmax.f32 %v738, 0.0
      %v831 = vmax.f32 %v743, 0.0
      %v832 = vmax.f32 %v746, 0.0
      %v833 = vmax.f32 %v751, 0.0
      %v834 = vmax.f32 %v754, 0.0
      %v835 = vmax.f32 %v759, 0.0
      %v836 = vmax.f32 %v762, 0.0
      %v837 = vmax.f32 %v767, 0.0
      %v838 = vmax.f32 %v770, 0.0
      %v839 = vmax.f32 %v775, 0.0
      %v840 = vmax.f32 %v778, 0.0
      %v841 = vsub.f32 %v781, %v811
      %v842 = vsub.f32 %v782, %v812
      %v843 = vsub.f32 %v783, %v813
      %v844 = vsub.f32 %v784, %v814
      %v845 = vsub.f32 %v785, %v815
      %v846 = vsub.f32 %v786, %v816
      %v847 = vsub.f32 %v787, %v817
      %v848 = vsub.f32 %v788, %v818
      %v849 = vsub.f32 %v789, %v819
      %v850 = vsub.f32 %v790, %v820
      %v851 = vsub.f32 %v791, %v821
      %v852 = vsub.f32 %v792, %v822
      %v853 = vsub.f32 %v793, %v823
      %v854 = vsub.f32 %v794, %v824
      %v855 = vsub.f32 %v795, %v825
      %v856 = vsub.f32 %v796, %v826
      %v857 = vsub.f32 %v797, %v827
      %v858 = vsub.f32 %v798, %v828
      %v859 = vsub.f32 %v799, %v829
      %v860 = vsub.f32 %v800, %v830
      %v861 = vsub.f32 %v801, %v831
      %v862 = vsub.f32 %v802, %v832
      %v863 = vsub.f32 %v803, %v833
      %v864 = vsub.f32 %v804, %v834
      %v865 = vsub.f32 %v805, %v835
      %v866 = vsub.f32 %v806, %v836
      %v867 = vsub.f32 %v807, %v837
      %v868 = vsub.f32 %v808, %v838
      %v869 = vsub.f32 %v809, %v839
      %v870 = vsub.f32 %v810, %v840
      %871 = vst [vmem:[#allocation2] sm:$0xff] %v841
      %872 = vst [vmem:[#allocation2 + $0x48] sm:$0xff] %v842
      %873 = vst [vmem:[#allocation2 + $0x90] sm:$0xff] %v844
      %874 = vst [vmem:[#allocation2 + $0xd8] sm:$0xff] %v845
      %875 = vst [vmem:[#allocation2 + $0x120] sm:$0xff] %v847
      %876 = vst [vmem:[#allocation2 + $0x168] sm:$0xff] %v848
      %877 = vst [vmem:[#allocation2 + $0x1b0] sm:$0xff] %v850
      %878 = vst [vmem:[#allocation2 + $0x1f8] sm:$0xff] %v851
      %879 = vst [vmem:[#allocation2 + $0x240] sm:$0xff] %v853
      %880 = vst [vmem:[#allocation2 + $0x288] sm:$0xff] %v854
      %881 = vst [vmem:[#allocation2 + $0x2d0] sm:$0xff] %v856
      %882 = vst [vmem:[#allocation2 + $0x318] sm:$0xff] %v857
      %883 = vst [vmem:[#allocation2 + $0x360] sm:$0xff] %v859
      %884 = vst [vmem:[#allocation2 + $0x3a8] sm:$0xff] %v860
      %885 = vst [vmem:[#allocation2 + $0x3f0] sm:$0xff] %v862
      %886 = vst [vmem:[#allocation2 + $0x438] sm:$0xff] %v863
      %vm911 = vcmask 1046528
      %v912 = vrot.slane %v841, 1
      %v913 = vrot.slane %v842, 1
      %v914 = vsel %vm911, %v912, %v913
      %v915 = vrot.slane %v843, 1
      %v916 = vsel %vm911, %v913, %v915
      %v917 = vrot.slane %v844, 1
      %v918 = vrot.slane %v845, 1
      %v919 = vsel %vm911, %v917, %v918
      %v920 = vrot.slane %v846, 1
      %v921 = vsel %vm911, %v918, %v920
      %v922 = vrot.slane %v847, 1
      %v923 = vrot.slane %v848, 1
      %v924 = vsel %vm911, %v922, %v923
      %v925 = vrot.slane %v849, 1
      %v926 = vsel %vm911, %v923, %v925
      %v927 = vrot.slane %v850, 1
      %v928 = vrot.slane %v851, 1
      %v929 = vsel %vm911, %v927, %v928
      %v930 = vrot.slane %v852, 1
      %v931 = vsel %vm911, %v928, %v930
      %v932 = vrot.slane %v853, 1
      %v933 = vrot.slane %v854, 1
      %v934 = vsel %vm911, %v932, %v933
      %v935 = vrot.slane %v855, 1
      %v936 = vsel %vm911, %v933, %v935
      %v937 = vrot.slane %v856, 1
      %v938 = vrot.slane %v857, 1
      %v939 = vsel %vm911, %v937, %v938
      %v940 = vrot.slane %v858, 1
      %v941 = vsel %vm911, %v938, %v940
      %v942 = vrot.slane %v859, 1
      %v943 = vrot.slane %v860, 1
      %v944 = vsel %vm911, %v942, %v943
      %v945 = vrot.slane %v861, 1
      %v946 = vsel %vm911, %v943, %v945
      %v947 = vrot.slane %v862, 1
      %v948 = vrot.slane %v863, 1
      %v949 = vsel %vm911, %v947, %v948
      %v950 = vrot.slane %v864, 1
      %v951 = vsel %vm911, %v948, %v950
      %968 = vst [vmem:[#allocation2 + $0x8] sm:$0xff] %v914
      %969 = vst [vmem:[#allocation2 + $0x50] sm:$0xff] %v916
      %970 = vst [vmem:[#allocation2 + $0x98] sm:$0xff] %v919
      %971 = vst [vmem:[#allocation2 + $0xe0] sm:$0xff] %v921
      %972 = vst [vmem:[#allocation2 + $0x128] sm:$0xff] %v924
      %973 = vst [vmem:[#allocation2 + $0x170] sm:$0xff] %v926
      %974 = vst [vmem:[#allocation2 + $0x1b8] sm:$0xff] %v929
      %975 = vst [vmem:[#allocation2 + $0x200] sm:$0xff] %v931
      %976 = vst [vmem:[#allocation2 + $0x248] sm:$0xff] %v934
      %977 = vst [vmem:[#allocation2 + $0x290] sm:$0xff] %v936
      %978 = vst [vmem:[#allocation2 + $0x2d8] sm:$0xff] %v939
      %979 = vst [vmem:[#allocation2 + $0x320] sm:$0xff] %v941
      %980 = vst [vmem:[#allocation2 + $0x368] sm:$0xff] %v944
      %981 = vst [vmem:[#allocation2 + $0x3b0] sm:$0xff] %v946
      %982 = vst [vmem:[#allocation2 + $0x3f8] sm:$0xff] %v949
      %983 = vst [vmem:[#allocation2 + $0x440] sm:$0xff] %v951
      %vm984 = vcmask 1045504
      %v985 = vrot.slane %v841, 2
      %v986 = vrot.slane %v842, 2
      %v987 = vsel %vm984, %v985, %v986
      %v988 = vrot.slane %v843, 2
      %v989 = vsel %vm984, %v986, %v988
      %v990 = vrot.slane %v844, 2
      %v991 = vrot.slane %v845, 2
      %v992 = vsel %vm984, %v990, %v991
      %v993 = vrot.slane %v846, 2
      %v994 = vsel %vm984, %v991, %v993
      %v995 = vrot.slane %v847, 2
      %v996 = vrot.slane %v848, 2
      %v997 = vsel %vm984, %v995, %v996
      %v998 = vrot.slane %v849, 2
      %v999 = vsel %vm984, %v996, %v998
      %v1000 = vrot.slane %v850, 2
      %v1001 = vrot.slane %v851, 2
      %v1002 = vsel %vm984, %v1000, %v1001
      %v1003 = vrot.slane %v852, 2
      %v1004 = vsel %vm984, %v1001, %v1003
      %v1005 = vrot.slane %v853, 2
      %v1006 = vrot.slane %v854, 2
      %v1007 = vsel %vm984, %v1005, %v1006
      %v1008 = vrot.slane %v855, 2
      %v1009 = vsel %vm984, %v1006, %v1008
      %v1010 = vrot.slane %v856, 2
      %v1011 = vrot.slane %v857, 2
      %v1012 = vsel %vm984, %v1010, %v1011
      %v1013 = vrot.slane %v858, 2
      %v1014 = vsel %vm984, %v1011, %v1013
      %v1015 = vrot.slane %v859, 2
      %v1016 = vrot.slane %v860, 2
      %v1017 = vsel %vm984, %v1015, %v1016
      %v1018 = vrot.slane %v861, 2
      %v1019 = vsel %vm984, %v1016, %v1018
      %v1020 = vrot.slane %v862, 2
      %v1021 = vrot.slane %v863, 2
      %v1022 = vsel %vm984, %v1020, %v1021
      %v1023 = vrot.slane %v864, 2
      %v1024 = vsel %vm984, %v1021, %v1023
      %1041 = vst [vmem:[#allocation2 + $0x10] sm:$0xff] %v987
      %1042 = vst [vmem:[#allocation2 + $0x58] sm:$0xff] %v989
      %1043 = vst [vmem:[#allocation2 + $0xa0] sm:$0xff] %v992
      %1044 = vst [vmem:[#allocation2 + $0xe8] sm:$0xff] %v994
      %1045 = vst [vmem:[#allocation2 + $0x130] sm:$0xff] %v997
      %1046 = vst [vmem:[#allocation2 + $0x178] sm:$0xff] %v999
      %1047 = vst [vmem:[#allocation2 + $0x1c0] sm:$0xff] %v1002
      %1048 = vst [vmem:[#allocation2 + $0x208] sm:$0xff] %v1004
      %1049 = vst [vmem:[#allocation2 + $0x250] sm:$0xff] %v1007
      %1050 = vst [vmem:[#allocation2 + $0x298] sm:$0xff] %v1009
      %1051 = vst [vmem:[#allocation2 + $0x2e0] sm:$0xff] %v1012
      %1052 = vst [vmem:[#allocation2 + $0x328] sm:$0xff] %v1014
      %1053 = vst [vmem:[#allocation2 + $0x370] sm:$0xff] %v1017
      %1054 = vst [vmem:[#allocation2 + $0x3b8] sm:$0xff] %v1019
      %1055 = vst [vmem:[#allocation2 + $0x400] sm:$0xff] %v1022
      %1056 = vst [vmem:[#allocation2 + $0x448] sm:$0xff] %v1024
      %1057 = vst [vmem:[#allocation2 + $0x18] sm:$0xff] %v844
      %1058 = vst [vmem:[#allocation2 + $0x60] sm:$0xff] %v845
      %1059 = vst [vmem:[#allocation2 + $0xa8] sm:$0xff] %v847
      %1060 = vst [vmem:[#allocation2 + $0xf0] sm:$0xff] %v848
      %1061 = vst [vmem:[#allocation2 + $0x138] sm:$0xff] %v850
      %1062 = vst [vmem:[#allocation2 + $0x180] sm:$0xff] %v851
      %1063 = vst [vmem:[#allocation2 + $0x1c8] sm:$0xff] %v853
      %1064 = vst [vmem:[#allocation2 + $0x210] sm:$0xff] %v854
      %1065 = vst [vmem:[#allocation2 + $0x258] sm:$0xff] %v856
      %1066 = vst [vmem:[#allocation2 + $0x2a0] sm:$0xff] %v857
      %1067 = vst [vmem:[#allocation2 + $0x2e8] sm:$0xff] %v859
      %1068 = vst [vmem:[#allocation2 + $0x330] sm:$0xff] %v860
      %1069 = vst [vmem:[#allocation2 + $0x378] sm:$0xff] %v862
      %1070 = vst [vmem:[#allocation2 + $0x3c0] sm:$0xff] %v863
      %1071 = vst [vmem:[#allocation2 + $0x408] sm:$0xff] %v865
      %1072 = vst [vmem:[#allocation2 + $0x450] sm:$0xff] %v866
      %v1076 = vrot.slane %v865, 1
      %v1077 = vrot.slane %v866, 1
      %v1078 = vsel %vm911, %v1076, %v1077
      %v1079 = vrot.slane %v867, 1
      %v1080 = vsel %vm911, %v1077, %v1079
      %1083 = vst [vmem:[#allocation2 + $0x20] sm:$0xff] %v919
      %1084 = vst [vmem:[#allocation2 + $0x68] sm:$0xff] %v921
      %1085 = vst [vmem:[#allocation2 + $0xb0] sm:$0xff] %v924
      %1086 = vst [vmem:[#allocation2 + $0xf8] sm:$0xff] %v926
      %1087 = vst [vmem:[#allocation2 + $0x140] sm:$0xff] %v929
      %1088 = vst [vmem:[#allocation2 + $0x188] sm:$0xff] %v931
      %1089 = vst [vmem:[#allocation2 + $0x1d0] sm:$0xff] %v934
      %1090 = vst [vmem:[#allocation2 + $0x218] sm:$0xff] %v936
      %1091 = vst [vmem:[#allocation2 + $0x260] sm:$0xff] %v939
      %1092 = vst [vmem:[#allocation2 + $0x2a8] sm:$0xff] %v941
      %1093 = vst [vmem:[#allocation2 + $0x2f0] sm:$0xff] %v944
      %1094 = vst [vmem:[#allocation2 + $0x338] sm:$0xff] %v946
      %1095 = vst [vmem:[#allocation2 + $0x380] sm:$0xff] %v949
      %1096 = vst [vmem:[#allocation2 + $0x3c8] sm:$0xff] %v951
      %1097 = vst [vmem:[#allocation2 + $0x410] sm:$0xff] %v1078
      %1098 = vst [vmem:[#allocation2 + $0x458] sm:$0xff] %v1080
      %v1099 = vrot.slane %v865, 2
      %v1100 = vrot.slane %v866, 2
      %v1101 = vsel %vm984, %v1099, %v1100
      %v1102 = vrot.slane %v867, 2
      %v1103 = vsel %vm984, %v1100, %v1102
      %1106 = vst [vmem:[#allocation2 + $0x28] sm:$0xff] %v992
      %1107 = vst [vmem:[#allocation2 + $0x70] sm:$0xff] %v994
      %1108 = vst [vmem:[#allocation2 + $0xb8] sm:$0xff] %v997
      %1109 = vst [vmem:[#allocation2 + $0x100] sm:$0xff] %v999
      %1110 = vst [vmem:[#allocation2 + $0x148] sm:$0xff] %v1002
      %1111 = vst [vmem:[#allocation2 + $0x190] sm:$0xff] %v1004
      %1112 = vst [vmem:[#allocation2 + $0x1d8] sm:$0xff] %v1007
      %1113 = vst [vmem:[#allocation2 + $0x220] sm:$0xff] %v1009
      %1114 = vst [vmem:[#allocation2 + $0x268] sm:$0xff] %v1012
      %1115 = vst [vmem:[#allocation2 + $0x2b0] sm:$0xff] %v1014
      %1116 = vst [vmem:[#allocation2 + $0x2f8] sm:$0xff] %v1017
      %1117 = vst [vmem:[#allocation2 + $0x340] sm:$0xff] %v1019
      %1118 = vst [vmem:[#allocation2 + $0x388] sm:$0xff] %v1022
      %1119 = vst [vmem:[#allocation2 + $0x3d0] sm:$0xff] %v1024
      %1120 = vst [vmem:[#allocation2 + $0x418] sm:$0xff] %v1101
      %1121 = vst [vmem:[#allocation2 + $0x460] sm:$0xff] %v1103
      %1122 = vst [vmem:[#allocation2 + $0x30] sm:$0xff] %v847
      %1123 = vst [vmem:[#allocation2 + $0x78] sm:$0xff] %v848
      %1124 = vst [vmem:[#allocation2 + $0xc0] sm:$0xff] %v850
      %1125 = vst [vmem:[#allocation2 + $0x108] sm:$0xff] %v851
      %1126 = vst [vmem:[#allocation2 + $0x150] sm:$0xff] %v853
      %1127 = vst [vmem:[#allocation2 + $0x198] sm:$0xff] %v854
      %1128 = vst [vmem:[#allocation2 + $0x1e0] sm:$0xff] %v856
      %1129 = vst [vmem:[#allocation2 + $0x228] sm:$0xff] %v857
      %1130 = vst [vmem:[#allocation2 + $0x270] sm:$0xff] %v859
      %1131 = vst [vmem:[#allocation2 + $0x2b8] sm:$0xff] %v860
      %1132 = vst [vmem:[#allocation2 + $0x300] sm:$0xff] %v862
      %1133 = vst [vmem:[#allocation2 + $0x348] sm:$0xff] %v863
      %1134 = vst [vmem:[#allocation2 + $0x390] sm:$0xff] %v865
      %1135 = vst [vmem:[#allocation2 + $0x3d8] sm:$0xff] %v866
      %1136 = vst [vmem:[#allocation2 + $0x420] sm:$0xff] %v868
      %1137 = vst [vmem:[#allocation2 + $0x468] sm:$0xff] %v869
      %v1141 = vrot.slane %v868, 1
      %v1142 = vrot.slane %v869, 1
      %v1143 = vsel %vm911, %v1141, %v1142
      %v1144 = vrot.slane %v870, 1
      %v1145 = vsel %vm911, %v1142, %v1144
      %1148 = vst [vmem:[#allocation2 + $0x38] sm:$0xff] %v924
      %1149 = vst [vmem:[#allocation2 + $0x80] sm:$0xff] %v926
      %1150 = vst [vmem:[#allocation2 + $0xc8] sm:$0xff] %v929
      %1151 = vst [vmem:[#allocation2 + $0x110] sm:$0xff] %v931
      %1152 = vst [vmem:[#allocation2 + $0x158] sm:$0xff] %v934
      %1153 = vst [vmem:[#allocation2 + $0x1a0] sm:$0xff] %v936
      %1154 = vst [vmem:[#allocation2 + $0x1e8] sm:$0xff] %v939
      %1155 = vst [vmem:[#allocation2 + $0x230] sm:$0xff] %v941
      %1156 = vst [vmem:[#allocation2 + $0x278] sm:$0xff] %v944
      %1157 = vst [vmem:[#allocation2 + $0x2c0] sm:$0xff] %v946
      %1158 = vst [vmem:[#allocation2 + $0x308] sm:$0xff] %v949
      %1159 = vst [vmem:[#allocation2 + $0x350] sm:$0xff] %v951
      %1160 = vst [vmem:[#allocation2 + $0x398] sm:$0xff] %v1078
      %1161 = vst [vmem:[#allocation2 + $0x3e0] sm:$0xff] %v1080
      %1162 = vst [vmem:[#allocation2 + $0x428] sm:$0xff] %v1143
      %1163 = vst [vmem:[#allocation2 + $0x470] sm:$0xff] %v1145
      %v1164 = vrot.slane %v868, 2
      %v1165 = vrot.slane %v869, 2
      %v1166 = vsel %vm984, %v1164, %v1165
      %v1167 = vrot.slane %v870, 2
      %v1168 = vsel %vm984, %v1165, %v1167
      %1171 = vst [vmem:[#allocation2 + $0x40] sm:$0xff] %v997
      %1172 = vst [vmem:[#allocation2 + $0x88] sm:$0xff] %v999
      %1173 = vst [vmem:[#allocation2 + $0xd0] sm:$0xff] %v1002
      %1174 = vst [vmem:[#allocation2 + $0x118] sm:$0xff] %v1004
      %1175 = vst [vmem:[#allocation2 + $0x160] sm:$0xff] %v1007
      %1176 = vst [vmem:[#allocation2 + $0x1a8] sm:$0xff] %v1009
      %1177 = vst [vmem:[#allocation2 + $0x1f0] sm:$0xff] %v1012
      %1178 = vst [vmem:[#allocation2 + $0x238] sm:$0xff] %v1014
      %1179 = vst [vmem:[#allocation2 + $0x280] sm:$0xff] %v1017
      %1180 = vst [vmem:[#allocation2 + $0x2c8] sm:$0xff] %v1019
      %1181 = vst [vmem:[#allocation2 + $0x310] sm:$0xff] %v1022
      %1182 = vst [vmem:[#allocation2 + $0x358] sm:$0xff] %v1024
      %1183 = vst [vmem:[#allocation2 + $0x3a0] sm:$0xff] %v1101
      %1184 = vst [vmem:[#allocation2 + $0x3e8] sm:$0xff] %v1103
      %1185 = vst [vmem:[#allocation2 + $0x430] sm:$0xff] %v1166
      %1186 = vst [vmem:[#allocation2 + $0x478] sm:$0xff] %v1168
      %v1187 = vld [vmem:[#allocation2] sm:$0xff]
      %v1188 = vld [vmem:[#allocation2 + $0x8] sm:$0xff]
      %v1189 = vld [vmem:[#allocation2 + $0x10] sm:$0xff]
      %v1190 = vld [vmem:[#allocation2 + $0x18] sm:$0xff]
      %v1191 = vld [vmem:[#allocation2 + $0x20] sm:$0xff]
      %v1192 = vld [vmem:[#allocation2 + $0x28] sm:$0xff]
      %v1193 = vld [vmem:[#allocation2 + $0x30] sm:$0xff]
      %v1194 = vld [vmem:[#allocation2 + $0x38] sm:$0xff]
      %v1195 = vld [vmem:[#allocation2 + $0x40] sm:$0xff]
      %v1196 = vld [vmem:[#allocation2 + $0x48] sm:$0xff]
      %v1197 = vld [vmem:[#allocation2 + $0x50] sm:$0xff]
      %v1198 = vld [vmem:[#allocation2 + $0x58] sm:$0xff]
      %v1199 = vld [vmem:[#allocation2 + $0x60] sm:$0xff]
      %v1200 = vld [vmem:[#allocation2 + $0x68] sm:$0xff]
      %v1201 = vld [vmem:[#allocation2 + $0x70] sm:$0xff]
      %v1202 = vld [vmem:[#allocation2 + $0x78] sm:$0xff]
      %v1203 = vld [vmem:[#allocation2 + $0x80] sm:$0xff]
      %v1204 = vld [vmem:[#allocation2 + $0x88] sm:$0xff]
      %v1205 = vld [vmem:[#allocation2 + $0x90] sm:$0xff]
      %v1206 = vld [vmem:[#allocation2 + $0x98] sm:$0xff]
      %v1207 = vld [vmem:[#allocation2 + $0xa0] sm:$0xff]
      %v1208 = vld [vmem:[#allocation2 + $0xa8] sm:$0xff]
      %v1209 = vld [vmem:[#allocation2 + $0xb0] sm:$0xff]
      %v1210 = vld [vmem:[#allocation2 + $0xb8] sm:$0xff]
      %v1211 = vld [vmem:[#allocation2 + $0xc0] sm:$0xff]
      %v1212 = vld [vmem:[#allocation2 + $0xc8] sm:$0xff]
      %v1213 = vld [vmem:[#allocation2 + $0xd0] sm:$0xff]
      %v1214 = vld [vmem:[#allocation2 + $0xd8] sm:$0xff]
      %v1215 = vld [vmem:[#allocation2 + $0xe0] sm:$0xff]
      %v1216 = vld [vmem:[#allocation2 + $0xe8] sm:$0xff]
      %v1217 = vld [vmem:[#allocation2 + $0xf0] sm:$0xff]
      %v1218 = vld [vmem:[#allocation2 + $0xf8] sm:$0xff]
      %v1219 = vld [vmem:[#allocation2 + $0x100] sm:$0xff]
      %v1220 = vld [vmem:[#allocation2 + $0x108] sm:$0xff]
      %v1221 = vld [vmem:[#allocation2 + $0x110] sm:$0xff]
      %v1222 = vld [vmem:[#allocation2 + $0x118] sm:$0xff]
      %v1223 = vld [vmem:[#allocation2 + $0x120] sm:$0xff]
      %v1224 = vld [vmem:[#allocation2 + $0x128] sm:$0xff]
      %v1225 = vld [vmem:[#allocation2 + $0x130] sm:$0xff]
      %v1226 = vld [vmem:[#allocation2 + $0x138] sm:$0xff]
      %v1227 = vld [vmem:[#allocation2 + $0x140] sm:$0xff]
      %v1228 = vld [vmem:[#allocation2 + $0x148] sm:$0xff]
      %v1229 = vld [vmem:[#allocation2 + $0x150] sm:$0xff]
      %v1230 = vld [vmem:[#allocation2 + $0x158] sm:$0xff]
      %v1231 = vld [vmem:[#allocation2 + $0x160] sm:$0xff]
      %v1232 = vld [vmem:[#allocation2 + $0x168] sm:$0xff]
      %v1233 = vld [vmem:[#allocation2 + $0x170] sm:$0xff]
      %v1234 = vld [vmem:[#allocation2 + $0x178] sm:$0xff]
      %v1235 = vld [vmem:[#allocation2 + $0x180] sm:$0xff]
      %v1236 = vld [vmem:[#allocation2 + $0x188] sm:$0xff]
      %v1237 = vld [vmem:[#allocation2 + $0x190] sm:$0xff]
      %v1238 = vld [vmem:[#allocation2 + $0x198] sm:$0xff]
      %v1239 = vld [vmem:[#allocation2 + $0x1a0] sm:$0xff]
      %v1240 = vld [vmem:[#allocation2 + $0x1a8] sm:$0xff]
      %v1241 = vld [vmem:[#allocation2 + $0x1b0] sm:$0xff]
      %v1242 = vld [vmem:[#allocation2 + $0x1b8] sm:$0xff]
      %v1243 = vld [vmem:[#allocation2 + $0x1c0] sm:$0xff]
      %v1244 = vld [vmem:[#allocation2 + $0x1c8] sm:$0xff]
      %v1245 = vld [vmem:[#allocation2 + $0x1d0] sm:$0xff]
      %v1246 = vld [vmem:[#allocation2 + $0x1d8] sm:$0xff]
      %v1247 = vld [vmem:[#allocation2 + $0x1e0] sm:$0xff]
      %v1248 = vld [vmem:[#allocation2 + $0x1e8] sm:$0xff]
      %v1249 = vld [vmem:[#allocation2 + $0x1f0] sm:$0xff]
      %v1250 = vld [vmem:[#allocation2 + $0x1f8] sm:$0xff]
      %v1251 = vld [vmem:[#allocation2 + $0x200] sm:$0xff]
      %v1252 = vld [vmem:[#allocation2 + $0x208] sm:$0xff]
      %v1253 = vld [vmem:[#allocation2 + $0x210] sm:$0xff]
      %v1254 = vld [vmem:[#allocation2 + $0x218] sm:$0xff]
      %v1255 = vld [vmem:[#allocation2 + $0x220] sm:$0xff]
      %v1256 = vld [vmem:[#allocation2 + $0x228] sm:$0xff]
      %v1257 = vld [vmem:[#allocation2 + $0x230] sm:$0xff]
      %v1258 = vld [vmem:[#allocation2 + $0x238] sm:$0xff]
      %v1259 = vld [vmem:[#allocation2 + $0x240] sm:$0xff]
      %v1260 = vld [vmem:[#allocation2 + $0x248] sm:$0xff]
      %v1261 = vld [vmem:[#allocation2 + $0x250] sm:$0xff]
      %v1262 = vld [vmem:[#allocation2 + $0x258] sm:$0xff]
      %v1263 = vld [vmem:[#allocation2 + $0x260] sm:$0xff]
      %v1264 = vld [vmem:[#allocation2 + $0x268] sm:$0xff]
      %v1265 = vld [vmem:[#allocation2 + $0x270] sm:$0xff]
      %v1266 = vld [vmem:[#allocation2 + $0x278] sm:$0xff]
      %v1267 = vld [vmem:[#allocation2 + $0x280] sm:$0xff]
      %v1268 = vld [vmem:[#allocation2 + $0x288] sm:$0xff]
      %v1269 = vld [vmem:[#allocation2 + $0x290] sm:$0xff]
      %v1270 = vld [vmem:[#allocation2 + $0x298] sm:$0xff]
      %v1271 = vld [vmem:[#allocation2 + $0x2a0] sm:$0xff]
      %v1272 = vld [vmem:[#allocation2 + $0x2a8] sm:$0xff]
      %v1273 = vld [vmem:[#allocation2 + $0x2b0] sm:$0xff]
      %v1274 = vld [vmem:[#allocation2 + $0x2b8] sm:$0xff]
      %v1275 = vld [vmem:[#allocation2 + $0x2c0] sm:$0xff]
      %v1276 = vld [vmem:[#allocation2 + $0x2c8] sm:$0xff]
      %v1277 = vld [vmem:[#allocation2 + $0x2d0] sm:$0xff]
      %v1278 = vld [vmem:[#allocation2 + $0x2d8] sm:$0xff]
      %v1279 = vld [vmem:[#allocation2 + $0x2e0] sm:$0xff]
      %v1280 = vld [vmem:[#allocation2 + $0x2e8] sm:$0xff]
      %v1281 = vld [vmem:[#allocation2 + $0x2f0] sm:$0xff]
      %v1282 = vld [vmem:[#allocation2 + $0x2f8] sm:$0xff]
      %v1283 = vld [vmem:[#allocation2 + $0x300] sm:$0xff]
      %v1284 = vld [vmem:[#allocation2 + $0x308] sm:$0xff]
      %v1285 = vld [vmem:[#allocation2 + $0x310] sm:$0xff]
      %v1286 = vld [vmem:[#allocation2 + $0x318] sm:$0xff]
      %v1287 = vld [vmem:[#allocation2 + $0x320] sm:$0xff]
      %v1288 = vld [vmem:[#allocation2 + $0x328] sm:$0xff]
      %v1289 = vld [vmem:[#allocation2 + $0x330] sm:$0xff]
      %v1290 = vld [vmem:[#allocation2 + $0x338] sm:$0xff]
      %v1291 = vld [vmem:[#allocation2 + $0x340] sm:$0xff]
      %v1292 = vld [vmem:[#allocation2 + $0x348] sm:$0xff]
      %v1293 = vld [vmem:[#allocation2 + $0x350] sm:$0xff]
      %v1294 = vld [vmem:[#allocation2 + $0x358] sm:$0xff]
      %v1295 = vld [vmem:[#allocation2 + $0x360] sm:$0xff]
      %v1296 = vld [vmem:[#allocation2 + $0x368] sm:$0xff]
      %v1297 = vld [vmem:[#allocation2 + $0x370] sm:$0xff]
      %v1298 = vld [vmem:[#allocation2 + $0x378] sm:$0xff]
      %v1299 = vld [vmem:[#allocation2 + $0x380] sm:$0xff]
      %v1300 = vld [vmem:[#allocation2 + $0x388] sm:$0xff]
      %v1301 = vld [vmem:[#allocation2 + $0x390] sm:$0xff]
      %v1302 = vld [vmem:[#allocation2 + $0x398] sm:$0xff]
      %v1303 = vld [vmem:[#allocation2 + $0x3a0] sm:$0xff]
      %v1304 = vld [vmem:[#allocation2 + $0x3a8] sm:$0xff]
      %v1305 = vld [vmem:[#allocation2 + $0x3b0] sm:$0xff]
      %v1306 = vld [vmem:[#allocation2 + $0x3b8] sm:$0xff]
      %v1307 = vld [vmem:[#allocation2 + $0x3c0] sm:$0xff]
      %v1308 = vld [vmem:[#allocation2 + $0x3c8] sm:$0xff]
      %v1309 = vld [vmem:[#allocation2 + $0x3d0] sm:$0xff]
      %v1310 = vld [vmem:[#allocation2 + $0x3d8] sm:$0xff]
      %v1311 = vld [vmem:[#allocation2 + $0x3e0] sm:$0xff]
      %v1312 = vld [vmem:[#allocation2 + $0x3e8] sm:$0xff]
      %v1313 = vld [vmem:[#allocation2 + $0x3f0] sm:$0xff]
      %v1314 = vld [vmem:[#allocation2 + $0x3f8] sm:$0xff]
      %v1315 = vld [vmem:[#allocation2 + $0x400] sm:$0xff]
      %v1316 = vld [vmem:[#allocation2 + $0x408] sm:$0xff]
      %v1317 = vld [vmem:[#allocation2 + $0x410] sm:$0xff]
      %v1318 = vld [vmem:[#allocation2 + $0x418] sm:$0xff]
      %v1319 = vld [vmem:[#allocation2 + $0x420] sm:$0xff]
      %v1320 = vld [vmem:[#allocation2 + $0x428] sm:$0xff]
      %v1321 = vld [vmem:[#allocation2 + $0x430] sm:$0xff]
      %v1322 = vld [vmem:[#allocation2 + $0x438] sm:$0xff]
      %v1323 = vld [vmem:[#allocation2 + $0x440] sm:$0xff]
      %v1324 = vld [vmem:[#allocation2 + $0x448] sm:$0xff]
      %v1325 = vld [vmem:[#allocation2 + $0x450] sm:$0xff]
      %v1326 = vld [vmem:[#allocation2 + $0x458] sm:$0xff]
      %v1327 = vld [vmem:[#allocation2 + $0x460] sm:$0xff]
      %v1328 = vld [vmem:[#allocation2 + $0x468] sm:$0xff]
      %v1329 = vld [vmem:[#allocation2 + $0x470] sm:$0xff]
      %v1330 = vld [vmem:[#allocation2 + $0x478] sm:$0xff]
      %v1331 = vld [vmem:[%s2] sm:$0xff]
      %v1332 = vld [vmem:[%s2 + $0x8] sm:$0xff]
      %v1333 = vld [vmem:[%s2 + $0x10] sm:$0xff]
      %v1334 = vld [vmem:[%s2 + $0x18] sm:$0xff]
      %v1335 = vld [vmem:[%s2 + $0x20] sm:$0xff]
      %v1336 = vld [vmem:[%s2 + $0x28] sm:$0xff]
      %v1337 = vld [vmem:[%s2 + $0x30] sm:$0xff]
      %v1338 = vld [vmem:[%s2 + $0x38] sm:$0xff]
      %v1339 = vld [vmem:[%s2 + $0x40] sm:$0xff]
      %v1340 = vld [vmem:[%s2 + $0x48] sm:$0xff]
      %v1341 = vld [vmem:[%s2 + $0x50] sm:$0xff]
      %v1342 = vld [vmem:[%s2 + $0x58] sm:$0xff]
      %v1343 = vld [vmem:[%s2 + $0x60] sm:$0xff]
      %v1344 = vld [vmem:[%s2 + $0x68] sm:$0xff]
      %v1345 = vld [vmem:[%s2 + $0x70] sm:$0xff]
      %v1346 = vld [vmem:[%s2 + $0x78] sm:$0xff]
      %v1347 = vld [vmem:[%s2 + $0x80] sm:$0xff]
      %v1348 = vld [vmem:[%s2 + $0x88] sm:$0xff]
      %v1349 = vld [vmem:[%s2 + $0x90] sm:$0xff]
      %v1350 = vld [vmem:[%s2 + $0x98] sm:$0xff]
      %v1351 = vld [vmem:[%s2 + $0xa0] sm:$0xff]
      %v1352 = vld [vmem:[%s2 + $0xa8] sm:$0xff]
      %v1353 = vld [vmem:[%s2 + $0xb0] sm:$0xff]
      %v1354 = vld [vmem:[%s2 + $0xb8] sm:$0xff]
      %v1355 = vld [vmem:[%s2 + $0xc0] sm:$0xff]
      %v1356 = vld [vmem:[%s2 + $0xc8] sm:$0xff]
      %v1357 = vld [vmem:[%s2 + $0xd0] sm:$0xff]
      %v1358 = vld [vmem:[%s2 + $0xd8] sm:$0xff]
      %v1359 = vld [vmem:[%s2 + $0xe0] sm:$0xff]
      %v1360 = vld [vmem:[%s2 + $0xe8] sm:$0xff]
      %v1361 = vld [vmem:[%s2 + $0xf0] sm:$0xff]
      %v1362 = vld [vmem:[%s2 + $0xf8] sm:$0xff]
      %v1363 = vld [vmem:[%s2 + $0x100] sm:$0xff]
      %v1364 = vld [vmem:[%s2 + $0x108] sm:$0xff]
      %v1365 = vld [vmem:[%s2 + $0x110] sm:$0xff]
      %v1366 = vld [vmem:[%s2 + $0x118] sm:$0xff]
      %v1367 = vld [vmem:[%s2 + $0x120] sm:$0xff]
      %v1368 = vld [vmem:[%s2 + $0x128] sm:$0xff]
      %v1369 = vld [vmem:[%s2 + $0x130] sm:$0xff]
      %v1370 = vld [vmem:[%s2 + $0x138] sm:$0xff]
      %v1371 = vld [vmem:[%s2 + $0x140] sm:$0xff]
      %v1372 = vld [vmem:[%s2 + $0x148] sm:$0xff]
      %v1373 = vld [vmem:[%s2 + $0x150] sm:$0xff]
      %v1374 = vld [vmem:[%s2 + $0x158] sm:$0xff]
      %v1375 = vld [vmem:[%s2 + $0x160] sm:$0xff]
      %v1376 = vld [vmem:[%s2 + $0x168] sm:$0xff]
      %v1377 = vld [vmem:[%s2 + $0x170] sm:$0xff]
      %v1378 = vld [vmem:[%s2 + $0x178] sm:$0xff]
      %v1379 = vld [vmem:[%s2 + $0x180] sm:$0xff]
      %v1380 = vld [vmem:[%s2 + $0x188] sm:$0xff]
      %v1381 = vld [vmem:[%s2 + $0x190] sm:$0xff]
      %v1382 = vld [vmem:[%s2 + $0x198] sm:$0xff]
      %v1383 = vld [vmem:[%s2 + $0x1a0] sm:$0xff]
      %v1384 = vld [vmem:[%s2 + $0x1a8] sm:$0xff]
      %v1385 = vld [vmem:[%s2 + $0x1b0] sm:$0xff]
      %v1386 = vld [vmem:[%s2 + $0x1b8] sm:$0xff]
      %v1387 = vld [vmem:[%s2 + $0x1c0] sm:$0xff]
      %v1388 = vld [vmem:[%s2 + $0x1c8] sm:$0xff]
      %v1389 = vld [vmem:[%s2 + $0x1d0] sm:$0xff]
      %v1390 = vld [vmem:[%s2 + $0x1d8] sm:$0xff]
      %v1391 = vld [vmem:[%s2 + $0x1e0] sm:$0xff]
      %v1392 = vld [vmem:[%s2 + $0x1e8] sm:$0xff]
      %v1393 = vld [vmem:[%s2 + $0x1f0] sm:$0xff]
      %v1394 = vld [vmem:[%s2 + $0x1f8] sm:$0xff]
      %v1395 = vld [vmem:[%s2 + $0x200] sm:$0xff]
      %v1396 = vld [vmem:[%s2 + $0x208] sm:$0xff]
      %v1397 = vld [vmem:[%s2 + $0x210] sm:$0xff]
      %v1398 = vld [vmem:[%s2 + $0x218] sm:$0xff]
      %v1399 = vld [vmem:[%s2 + $0x220] sm:$0xff]
      %v1400 = vld [vmem:[%s2 + $0x228] sm:$0xff]
      %v1401 = vld [vmem:[%s2 + $0x230] sm:$0xff]
      %v1402 = vld [vmem:[%s2 + $0x238] sm:$0xff]
      %v1403 = vld [vmem:[%s2 + $0x240] sm:$0xff]
      %v1404 = vld [vmem:[%s2 + $0x248] sm:$0xff]
      %v1405 = vld [vmem:[%s2 + $0x250] sm:$0xff]
      %v1406 = vld [vmem:[%s2 + $0x258] sm:$0xff]
      %v1407 = vld [vmem:[%s2 + $0x260] sm:$0xff]
      %v1408 = vld [vmem:[%s2 + $0x268] sm:$0xff]
      %v1409 = vld [vmem:[%s2 + $0x270] sm:$0xff]
      %v1410 = vld [vmem:[%s2 + $0x278] sm:$0xff]
      %v1411 = vld [vmem:[%s2 + $0x280] sm:$0xff]
      %v1412 = vld [vmem:[%s2 + $0x288] sm:$0xff]
      %v1413 = vld [vmem:[%s2 + $0x290] sm:$0xff]
      %v1414 = vld [vmem:[%s2 + $0x298] sm:$0xff]
      %v1415 = vld [vmem:[%s2 + $0x2a0] sm:$0xff]
      %v1416 = vld [vmem:[%s2 + $0x2a8] sm:$0xff]
      %v1417 = vld [vmem:[%s2 + $0x2b0] sm:$0xff]
      %v1418 = vld [vmem:[%s2 + $0x2b8] sm:$0xff]
      %v1419 = vld [vmem:[%s2 + $0x2c0] sm:$0xff]
      %v1420 = vld [vmem:[%s2 + $0x2c8] sm:$0xff]
      %v1421 = vld [vmem:[%s2 + $0x2d0] sm:$0xff]
      %v1422 = vld [vmem:[%s2 + $0x2d8] sm:$0xff]
      %v1423 = vld [vmem:[%s2 + $0x2e0] sm:$0xff]
      %v1424 = vld [vmem:[%s2 + $0x2e8] sm:$0xff]
      %v1425 = vld [vmem:[%s2 + $0x2f0] sm:$0xff]
      %v1426 = vld [vmem:[%s2 + $0x2f8] sm:$0xff]
      %v1427 = vld [vmem:[%s2 + $0x300] sm:$0xff]
      %v1428 = vld [vmem:[%s2 + $0x308] sm:$0xff]
      %v1429 = vld [vmem:[%s2 + $0x310] sm:$0xff]
      %v1430 = vld [vmem:[%s2 + $0x318] sm:$0xff]
      %v1431 = vld [vmem:[%s2 + $0x320] sm:$0xff]
      %v1432 = vld [vmem:[%s2 + $0x328] sm:$0xff]
      %v1433 = vld [vmem:[%s2 + $0x330] sm:$0xff]
      %v1434 = vld [vmem:[%s2 + $0x338] sm:$0xff]
      %v1435 = vld [vmem:[%s2 + $0x340] sm:$0xff]
      %v1436 = vld [vmem:[%s2 + $0x348] sm:$0xff]
      %v1437 = vld [vmem:[%s2 + $0x350] sm:$0xff]
      %v1438 = vld [vmem:[%s2 + $0x358] sm:$0xff]
      %v1439 = vld [vmem:[%s2 + $0x360] sm:$0xff]
      %v1440 = vld [vmem:[%s2 + $0x368] sm:$0xff]
      %v1441 = vld [vmem:[%s2 + $0x370] sm:$0xff]
      %v1442 = vld [vmem:[%s2 + $0x378] sm:$0xff]
      %v1443 = vld [vmem:[%s2 + $0x380] sm:$0xff]
      %v1444 = vld [vmem:[%s2 + $0x388] sm:$0xff]
      %v1445 = vld [vmem:[%s2 + $0x390] sm:$0xff]
      %v1446 = vld [vmem:[%s2 + $0x398] sm:$0xff]
      %v1447 = vld [vmem:[%s2 + $0x3a0] sm:$0xff]
      %v1448 = vld [vmem:[%s2 + $0x3a8] sm:$0xff]
      %v1449 = vld [vmem:[%s2 + $0x3b0] sm:$0xff]
      %v1450 = vld [vmem:[%s2 + $0x3b8] sm:$0xff]
      %v1451 = vld [vmem:[%s2 + $0x3c0] sm:$0xff]
      %v1452 = vld [vmem:[%s2 + $0x3c8] sm:$0xff]
      %v1453 = vld [vmem:[%s2 + $0x3d0] sm:$0xff]
      %v1454 = vld [vmem:[%s2 + $0x3d8] sm:$0xff]
      %v1455 = vld [vmem:[%s2 + $0x3e0] sm:$0xff]
      %v1456 = vld [vmem:[%s2 + $0x3e8] sm:$0xff]
      %v1457 = vld [vmem:[%s2 + $0x3f0] sm:$0xff]
      %v1458 = vld [vmem:[%s2 + $0x3f8] sm:$0xff]
      %v1459 = vld [vmem:[%s2 + $0x400] sm:$0xff]
      %v1460 = vld [vmem:[%s2 + $0x408] sm:$0xff]
      %v1461 = vld [vmem:[%s2 + $0x410] sm:$0xff]
      %v1462 = vld [vmem:[%s2 + $0x418] sm:$0xff]
      %v1463 = vld [vmem:[%s2 + $0x420] sm:$0xff]
      %v1464 = vld [vmem:[%s2 + $0x428] sm:$0xff]
      %v1465 = vld [vmem:[%s2 + $0x430] sm:$0xff]
      %v1466 = vld [vmem:[%s2 + $0x438] sm:$0xff]
      %v1467 = vld [vmem:[%s2 + $0x440] sm:$0xff]
      %v1468 = vld [vmem:[%s2 + $0x448] sm:$0xff]
      %v1469 = vld [vmem:[%s2 + $0x450] sm:$0xff]
      %v1470 = vld [vmem:[%s2 + $0x458] sm:$0xff]
      %v1471 = vld [vmem:[%s2 + $0x460] sm:$0xff]
      %v1472 = vld [vmem:[%s2 + $0x468] sm:$0xff]
      %v1473 = vld [vmem:[%s2 + $0x470] sm:$0xff]
      %v1474 = vld [vmem:[%s2 + $0x478] sm:$0xff]
      %1475 = vmatprep.subr.mxu0 0.0
      %1476 = vmatpush1.msra.mxu0 %v1346
      %1477 = vmatprep.subr.mxu0 0.0
      %1478 = vmatpush1.msra.mxu0 %v1345
      %1479 = vmatprep.subr.mxu0 0.0
      %1480 = vmatpush1.msra.mxu0 %v1344
      %1481 = vmatprep.subr.mxu0 0.0
      %1482 = vmatpush1.msra.mxu0 %v1343
      %1483 = vmatprep.subr.mxu0 0.0
      %1484 = vmatpush1.msra.mxu0 %v1342
      %1485 = vmatprep.subr.mxu0 0.0
      %1486 = vmatpush1.msra.mxu0 %v1341
      %1487 = vmatprep.subr.mxu0 0.0
      %1488 = vmatpush1.msra.mxu0 %v1340
      %1489 = vmatprep.subr.mxu0 0.0
      %1490 = vmatpush1.msra.mxu0 %v1339
      %1491 = vmatprep.subr.mxu0 0.0
      %1492 = vmatpush1.msra.mxu0 %v1338
      %1493 = vmatprep.subr.mxu0 0.0
      %1494 = vmatpush1.msra.mxu0 %v1337
      %1495 = vmatprep.subr.mxu0 0.0
      %1496 = vmatpush1.msra.mxu0 %v1336
      %1497 = vmatprep.subr.mxu0 0.0
      %1498 = vmatpush1.msra.mxu0 %v1335
      %1499 = vmatprep.subr.mxu0 0.0
      %1500 = vmatpush1.msra.mxu0 %v1334
      %1501 = vmatprep.subr.mxu0 0.0
      %1502 = vmatpush1.msra.mxu0 %v1333
      %1503 = vmatprep.subr.mxu0 0.0
      %1504 = vmatpush1.msra.mxu0 %v1332
      %1505 = vmatprep.subr.mxu0 0.0
      %1506 = vmatpush1.msra.mxu0 %v1331
      %1507 = vmatprep.subr.mxu0 0.0
      %1508 = vmatpush2.msra.mxu0 %v1362
      %1509 = vmatprep.subr.mxu0 0.0
      %1510 = vmatpush2.msra.mxu0 %v1361
      %1511 = vmatprep.subr.mxu0 0.0
      %1512 = vmatpush2.msra.mxu0 %v1360
      %1513 = vmatprep.subr.mxu0 0.0
      %1514 = vmatpush2.msra.mxu0 %v1359
      %1515 = vmatprep.subr.mxu0 0.0
      %1516 = vmatpush2.msra.mxu0 %v1358
      %1517 = vmatprep.subr.mxu0 0.0
      %1518 = vmatpush2.msra.mxu0 %v1357
      %1519 = vmatprep.subr.mxu0 0.0
      %1520 = vmatpush2.msra.mxu0 %v1356
      %1521 = vmatprep.subr.mxu0 0.0
      %1522 = vmatpush2.msra.mxu0 %v1355
      %1523 = vmatprep.subr.mxu0 0.0
      %1524 = vmatpush2.msra.mxu0 %v1354
      %1525 = vmatprep.subr.mxu0 0.0
      %1526 = vmatpush2.msra.mxu0 %v1353
      %1527 = vmatprep.subr.mxu0 0.0
      %1528 = vmatpush2.msra.mxu0 %v1352
      %1529 = vmatprep.subr.mxu0 0.0
      %1530 = vmatpush2.msra.mxu0 %v1351
      %1531 = vmatprep.subr.mxu0 0.0
      %1532 = vmatpush2.msra.mxu0 %v1350
      %1533 = vmatprep.subr.mxu0 0.0
      %1534 = vmatpush2.msra.mxu0 %v1349
      %1535 = vmatprep.subr.mxu0 0.0
      %1536 = vmatpush2.msra.mxu0 %v1348
      %1537 = vmatprep.subr.mxu0 0.0
      %1538 = vmatpush2.msra.mxu0 %v1347
      %1539 = vmatprep.mubr.f32.mxu0 %v1188
      %1540 = vmatmul.mubr.f32.gmra.mxu0 %v1187
      %v1541 = vpop.f32.mrf.mxu0
      %v1542 = vadd.f32 0.0, %v1541
      %v1543 = vpop.f32.mrf.mxu0
      %1544 = vmatprep.mubr.f32.mxu0 %v1197
      %1545 = vmatmul.mubr.f32.gmra.mxu0 %v1196
      %v1546 = vpop.f32.mrf.mxu0
      %v1547 = vadd.f32 0.0, %v1546
      %v1548 = vpop.f32.mrf.mxu0
      %1549 = vmatprep.mubr.f32.mxu0 %v1206
      %1550 = vmatmul.mubr.f32.gmra.mxu0 %v1205
      %v1551 = vpop.f32.mrf.mxu0
      %v1552 = vadd.f32 0.0, %v1551
      %v1553 = vpop.f32.mrf.mxu0
      %1554 = vmatprep.mubr.f32.mxu0 %v1215
      %1555 = vmatmul.mubr.f32.gmra.mxu0 %v1214
      %v1556 = vpop.f32.mrf.mxu0
      %v1557 = vadd.f32 0.0, %v1556
      %v1558 = vpop.f32.mrf.mxu0
      %1559 = vmatprep.mubr.f32.mxu0 %v1224
      %1560 = vmatmul.mubr.f32.gmra.mxu0 %v1223
      %v1561 = vpop.f32.mrf.mxu0
      %v1562 = vadd.f32 0.0, %v1561
      %v1563 = vpop.f32.mrf.mxu0
      %1564 = vmatprep.mubr.f32.mxu0 %v1233
      %1565 = vmatmul.mubr.f32.gmra.mxu0 %v1232
      %v1566 = vpop.f32.mrf.mxu0
      %v1567 = vadd.f32 0.0, %v1566
      %v1568 = vpop.f32.mrf.mxu0
      %1569 = vmatprep.mubr.f32.mxu0 %v1242
      %1570 = vmatmul.mubr.f32.gmra.mxu0 %v1241
      %v1571 = vpop.f32.mrf.mxu0
      %v1572 = vadd.f32 0.0, %v1571
      %v1573 = vpop.f32.mrf.mxu0
      %1574 = vmatprep.mubr.f32.mxu0 %v1251
      %1575 = vmatmul.mubr.f32.gmra.mxu0 %v1250
      %v1576 = vpop.f32.mrf.mxu0
      %v1577 = vadd.f32 0.0, %v1576
      %v1578 = vpop.f32.mrf.mxu0
      %1579 = vmatprep.mubr.f32.mxu0 %v1260
      %1580 = vmatmul.mubr.f32.gmra.mxu0 %v1259
      %v1581 = vpop.f32.mrf.mxu0
      %v1582 = vadd.f32 0.0, %v1581
      %v1583 = vpop.f32.mrf.mxu0
      %1584 = vmatprep.mubr.f32.mxu0 %v1269
      %1585 = vmatmul.mubr.f32.gmra.mxu0 %v1268
      %v1586 = vpop.f32.mrf.mxu0
      %v1587 = vadd.f32 0.0, %v1586
      %v1588 = vpop.f32.mrf.mxu0
      %1589 = vmatprep.mubr.f32.mxu0 %v1278
      %1590 = vmatmul.mubr.f32.gmra.mxu0 %v1277
      %v1591 = vpop.f32.mrf.mxu0
      %v1592 = vadd.f32 0.0, %v1591
      %v1593 = vpop.f32.mrf.mxu0
      %1594 = vmatprep.mubr.f32.mxu0 %v1287
      %1595 = vmatmul.mubr.f32.gmra.mxu0 %v1286
      %v1596 = vpop.f32.mrf.mxu0
      %v1597 = vadd.f32 0.0, %v1596
      %v1598 = vpop.f32.mrf.mxu0
      %1599 = vmatprep.mubr.f32.mxu0 %v1296
      %1600 = vmatmul.mubr.f32.gmra.mxu0 %v1295
      %v1601 = vpop.f32.mrf.mxu0
      %v1602 = vadd.f32 0.0, %v1601
      %v1603 = vpop.f32.mrf.mxu0
      %1604 = vmatprep.mubr.f32.mxu0 %v1305
      %1605 = vmatmul.mubr.f32.gmra.mxu0 %v1304
      %v1606 = vpop.f32.mrf.mxu0
      %v1607 = vadd.f32 0.0, %v1606
      %v1608 = vpop.f32.mrf.mxu0
      %1609 = vmatprep.mubr.f32.mxu0 %v1314
      %1610 = vmatmul.mubr.f32.gmra.mxu0 %v1313
      %v1611 = vpop.f32.mrf.mxu0
      %v1612 = vadd.f32 0.0, %v1611
      %v1613 = vpop.f32.mrf.mxu0
      %1614 = vmatprep.mubr.f32.mxu0 %v1323
      %1615 = vmatmul.mubr.f32.gmra.mxu0 %v1322
      %v1616 = vpop.f32.mrf.mxu0
      %v1617 = vadd.f32 0.0, %v1616
      %v1618 = vpop.f32.mrf.mxu0
      %1619 = vdwg.mxu0
      %1620 = vmatprep.subr.mxu0 0.0
      %1621 = vmatpush1.msra.mxu0 %v1378
      %1622 = vmatprep.subr.mxu0 0.0
      %1623 = vmatpush1.msra.mxu0 %v1377
      %1624 = vmatprep.subr.mxu0 0.0
      %1625 = vmatpush1.msra.mxu0 %v1376
      %1626 = vmatprep.subr.mxu0 0.0
      %1627 = vmatpush1.msra.mxu0 %v1375
      %1628 = vmatprep.subr.mxu0 0.0
      %1629 = vmatpush1.msra.mxu0 %v1374
      %1630 = vmatprep.subr.mxu0 0.0
      %1631 = vmatpush1.msra.mxu0 %v1373
      %1632 = vmatprep.subr.mxu0 0.0
      %1633 = vmatpush1.msra.mxu0 %v1372
      %1634 = vmatprep.subr.mxu0 0.0
      %1635 = vmatpush1.msra.mxu0 %v1371
      %1636 = vmatprep.subr.mxu0 0.0
      %1637 = vmatpush1.msra.mxu0 %v1370
      %1638 = vmatprep.subr.mxu0 0.0
      %1639 = vmatpush1.msra.mxu0 %v1369
      %1640 = vmatprep.subr.mxu0 0.0
      %1641 = vmatpush1.msra.mxu0 %v1368
      %1642 = vmatprep.subr.mxu0 0.0
      %1643 = vmatpush1.msra.mxu0 %v1367
      %1644 = vmatprep.subr.mxu0 0.0
      %1645 = vmatpush1.msra.mxu0 %v1366
      %1646 = vmatprep.subr.mxu0 0.0
      %1647 = vmatpush1.msra.mxu0 %v1365
      %1648 = vmatprep.subr.mxu0 0.0
      %1649 = vmatpush1.msra.mxu0 %v1364
      %1650 = vmatprep.subr.mxu0 0.0
      %1651 = vmatpush1.msra.mxu0 %v1363
      %1652 = vmatprep.subr.mxu0 0.0
      %1653 = vmatpush2.msra.mxu0 %v1394
      %1654 = vmatprep.subr.mxu0 0.0
      %1655 = vmatpush2.msra.mxu0 %v1393
      %1656 = vmatprep.subr.mxu0 0.0
      %1657 = vmatpush2.msra.mxu0 %v1392
      %1658 = vmatprep.subr.mxu0 0.0
      %1659 = vmatpush2.msra.mxu0 %v1391
      %1660 = vmatprep.subr.mxu0 0.0
      %1661 = vmatpush2.msra.mxu0 %v1390
      %1662 = vmatprep.subr.mxu0 0.0
      %1663 = vmatpush2.msra.mxu0 %v1389
      %1664 = vmatprep.subr.mxu0 0.0
      %1665 = vmatpush2.msra.mxu0 %v1388
      %1666 = vmatprep.subr.mxu0 0.0
      %1667 = vmatpush2.msra.mxu0 %v1387
      %1668 = vmatprep.subr.mxu0 0.0
      %1669 = vmatpush2.msra.mxu0 %v1386
      %1670 = vmatprep.subr.mxu0 0.0
      %1671 = vmatpush2.msra.mxu0 %v1385
      %1672 = vmatprep.subr.mxu0 0.0
      %1673 = vmatpush2.msra.mxu0 %v1384
      %1674 = vmatprep.subr.mxu0 0.0
      %1675 = vmatpush2.msra.mxu0 %v1383
      %1676 = vmatprep.subr.mxu0 0.0
      %1677 = vmatpush2.msra.mxu0 %v1382
      %1678 = vmatprep.subr.mxu0 0.0
      %1679 = vmatpush2.msra.mxu0 %v1381
      %1680 = vmatprep.subr.mxu0 0.0
      %1681 = vmatpush2.msra.mxu0 %v1380
      %1682 = vmatprep.subr.mxu0 0.0
      %1683 = vmatpush2.msra.mxu0 %v1379
      %1684 = vmatprep.mubr.f32.mxu0 %v1190
      %1685 = vmatmul.mubr.f32.gmra.mxu0 %v1189
      %v1686 = vpop.f32.mrf.mxu0
      %v1687 = vadd.f32 %v1542, %v1686
      %v1688 = vpop.f32.mrf.mxu0
      %1689 = vmatprep.mubr.f32.mxu0 %v1199
      %1690 = vmatmul.mubr.f32.gmra.mxu0 %v1198
      %v1691 = vpop.f32.mrf.mxu0
      %v1692 = vadd.f32 %v1547, %v1691
      %v1693 = vpop.f32.mrf.mxu0
      %1694 = vmatprep.mubr.f32.mxu0 %v1208
      %1695 = vmatmul.mubr.f32.gmra.mxu0 %v1207
      %v1696 = vpop.f32.mrf.mxu0
      %v1697 = vadd.f32 %v1552, %v1696
      %v1698 = vpop.f32.mrf.mxu0
      %1699 = vmatprep.mubr.f32.mxu0 %v1217
      %1700 = vmatmul.mubr.f32.gmra.mxu0 %v1216
      %v1701 = vpop.f32.mrf.mxu0
      %v1702 = vadd.f32 %v1557, %v1701
      %v1703 = vpop.f32.mrf.mxu0
      %1704 = vmatprep.mubr.f32.mxu0 %v1226
      %1705 = vmatmul.mubr.f32.gmra.mxu0 %v1225
      %v1706 = vpop.f32.mrf.mxu0
      %v1707 = vadd.f32 %v1562, %v1706
      %v1708 = vpop.f32.mrf.mxu0
      %1709 = vmatprep.mubr.f32.mxu0 %v1235
      %1710 = vmatmul.mubr.f32.gmra.mxu0 %v1234
      %v1711 = vpop.f32.mrf.mxu0
      %v1712 = vadd.f32 %v1567, %v1711
      %v1713 = vpop.f32.mrf.mxu0
      %1714 = vmatprep.mubr.f32.mxu0 %v1244
      %1715 = vmatmul.mubr.f32.gmra.mxu0 %v1243
      %v1716 = vpop.f32.mrf.mxu0
      %v1717 = vadd.f32 %v1572, %v1716
      %v1718 = vpop.f32.mrf.mxu0
      %1719 = vmatprep.mubr.f32.mxu0 %v1253
      %1720 = vmatmul.mubr.f32.gmra.mxu0 %v1252
      %v1721 = vpop.f32.mrf.mxu0
      %v1722 = vadd.f32 %v1577, %v1721
      %v1723 = vpop.f32.mrf.mxu0
      %1724 = vmatprep.mubr.f32.mxu0 %v1262
      %1725 = vmatmul.mubr.f32.gmra.mxu0 %v1261
      %v1726 = vpop.f32.mrf.mxu0
      %v1727 = vadd.f32 %v1582, %v1726
      %v1728 = vpop.f32.mrf.mxu0
      %1729 = vmatprep.mubr.f32.mxu0 %v1271
      %1730 = vmatmul.mubr.f32.gmra.mxu0 %v1270
      %v1731 = vpop.f32.mrf.mxu0
      %v1732 = vadd.f32 %v1587, %v1731
      %v1733 = vpop.f32.mrf.mxu0
      %1734 = vmatprep.mubr.f32.mxu0 %v1280
      %1735 = vmatmul.mubr.f32.gmra.mxu0 %v1279
      %v1736 = vpop.f32.mrf.mxu0
      %v1737 = vadd.f32 %v1592, %v1736
      %v1738 = vpop.f32.mrf.mxu0
      %1739 = vmatprep.mubr.f32.mxu0 %v1289
      %1740 = vmatmul.mubr.f32.gmra.mxu0 %v1288
      %v1741 = vpop.f32.mrf.mxu0
      %v1742 = vadd.f32 %v1597, %v1741
      %v1743 = vpop.f32.mrf.mxu0
      %1744 = vmatprep.mubr.f32.mxu0 %v1298
      %1745 = vmatmul.mubr.f32.gmra.mxu0 %v1297
      %v1746 = vpop.f32.mrf.mxu0
      %v1747 = vadd.f32 %v1602, %v1746
      %v1748 = vpop.f32.mrf.mxu0
      %1749 = vmatprep.mubr.f32.mxu0 %v1307
      %1750 = vmatmul.mubr.f32.gmra.mxu0 %v1306
      %v1751 = vpop.f32.mrf.mxu0
      %v1752 = vadd.f32 %v1607, %v1751
      %v1753 = vpop.f32.mrf.mxu0
      %1754 = vmatprep.mubr.f32.mxu0 %v1316
      %1755 = vmatmul.mubr.f32.gmra.mxu0 %v1315
      %v1756 = vpop.f32.mrf.mxu0
      %v1757 = vadd.f32 %v1612, %v1756
      %v1758 = vpop.f32.mrf.mxu0
      %1759 = vmatprep.mubr.f32.mxu0 %v1325
      %1760 = vmatmul.mubr.f32.gmra.mxu0 %v1324
      %v1761 = vpop.f32.mrf.mxu0
      %v1762 = vadd.f32 %v1617, %v1761
      %v1763 = vpop.f32.mrf.mxu0
      %1764 = vdwg.mxu0
      %1765 = vmatprep.subr.mxu0 0.0
      %1766 = vmatpush1.msra.mxu0 %v1410
      %1767 = vmatprep.subr.mxu0 0.0
      %1768 = vmatpush1.msra.mxu0 %v1409
      %1769 = vmatprep.subr.mxu0 0.0
      %1770 = vmatpush1.msra.mxu0 %v1408
      %1771 = vmatprep.subr.mxu0 0.0
      %1772 = vmatpush1.msra.mxu0 %v1407
      %1773 = vmatprep.subr.mxu0 0.0
      %1774 = vmatpush1.msra.mxu0 %v1406
      %1775 = vmatprep.subr.mxu0 0.0
      %1776 = vmatpush1.msra.mxu0 %v1405
      %1777 = vmatprep.subr.mxu0 0.0
      %1778 = vmatpush1.msra.mxu0 %v1404
      %1779 = vmatprep.subr.mxu0 0.0
      %1780 = vmatpush1.msra.mxu0 %v1403
      %1781 = vmatprep.subr.mxu0 0.0
      %1782 = vmatpush1.msra.mxu0 %v1402
      %1783 = vmatprep.subr.mxu0 0.0
      %1784 = vmatpush1.msra.mxu0 %v1401
      %1785 = vmatprep.subr.mxu0 0.0
      %1786 = vmatpush1.msra.mxu0 %v1400
      %1787 = vmatprep.subr.mxu0 0.0
      %1788 = vmatpush1.msra.mxu0 %v1399
      %1789 = vmatprep.subr.mxu0 0.0
      %1790 = vmatpush1.msra.mxu0 %v1398
      %1791 = vmatprep.subr.mxu0 0.0
      %1792 = vmatpush1.msra.mxu0 %v1397
      %1793 = vmatprep.subr.mxu0 0.0
      %1794 = vmatpush1.msra.mxu0 %v1396
      %1795 = vmatprep.subr.mxu0 0.0
      %1796 = vmatpush1.msra.mxu0 %v1395
      %1797 = vmatprep.subr.mxu0 0.0
      %1798 = vmatpush2.msra.mxu0 %v1426
      %1799 = vmatprep.subr.mxu0 0.0
      %1800 = vmatpush2.msra.mxu0 %v1425
      %1801 = vmatprep.subr.mxu0 0.0
      %1802 = vmatpush2.msra.mxu0 %v1424
      %1803 = vmatprep.subr.mxu0 0.0
      %1804 = vmatpush2.msra.mxu0 %v1423
      %1805 = vmatprep.subr.mxu0 0.0
      %1806 = vmatpush2.msra.mxu0 %v1422
      %1807 = vmatprep.subr.mxu0 0.0
      %1808 = vmatpush2.msra.mxu0 %v1421
      %1809 = vmatprep.subr.mxu0 0.0
      %1810 = vmatpush2.msra.mxu0 %v1420
      %1811 = vmatprep.subr.mxu0 0.0
      %1812 = vmatpush2.msra.mxu0 %v1419
      %1813 = vmatprep.subr.mxu0 0.0
      %1814 = vmatpush2.msra.mxu0 %v1418
      %1815 = vmatprep.subr.mxu0 0.0
      %1816 = vmatpush2.msra.mxu0 %v1417
      %1817 = vmatprep.subr.mxu0 0.0
      %1818 = vmatpush2.msra.mxu0 %v1416
      %1819 = vmatprep.subr.mxu0 0.0
      %1820 = vmatpush2.msra.mxu0 %v1415
      %1821 = vmatprep.subr.mxu0 0.0
      %1822 = vmatpush2.msra.mxu0 %v1414
      %1823 = vmatprep.subr.mxu0 0.0
      %1824 = vmatpush2.msra.mxu0 %v1413
      %1825 = vmatprep.subr.mxu0 0.0
      %1826 = vmatpush2.msra.mxu0 %v1412
      %1827 = vmatprep.subr.mxu0 0.0
      %1828 = vmatpush2.msra.mxu0 %v1411
      %1829 = vmatprep.mubr.f32.mxu0 %v1192
      %1830 = vmatmul.mubr.f32.gmra.mxu0 %v1191
      %v1831 = vpop.f32.mrf.mxu0
      %v1832 = vadd.f32 %v1687, %v1831
      %v1833 = vpop.f32.mrf.mxu0
      %1834 = vmatprep.mubr.f32.mxu0 %v1201
      %1835 = vmatmul.mubr.f32.gmra.mxu0 %v1200
      %v1836 = vpop.f32.mrf.mxu0
      %v1837 = vadd.f32 %v1692, %v1836
      %v1838 = vpop.f32.mrf.mxu0
      %1839 = vmatprep.mubr.f32.mxu0 %v1210
      %1840 = vmatmul.mubr.f32.gmra.mxu0 %v1209
      %v1841 = vpop.f32.mrf.mxu0
      %v1842 = vadd.f32 %v1697, %v1841
      %v1843 = vpop.f32.mrf.mxu0
      %1844 = vmatprep.mubr.f32.mxu0 %v1219
      %1845 = vmatmul.mubr.f32.gmra.mxu0 %v1218
      %v1846 = vpop.f32.mrf.mxu0
      %v1847 = vadd.f32 %v1702, %v1846
      %v1848 = vpop.f32.mrf.mxu0
      %1849 = vmatprep.mubr.f32.mxu0 %v1228
      %1850 = vmatmul.mubr.f32.gmra.mxu0 %v1227
      %v1851 = vpop.f32.mrf.mxu0
      %v1852 = vadd.f32 %v1707, %v1851
      %v1853 = vpop.f32.mrf.mxu0
      %1854 = vmatprep.mubr.f32.mxu0 %v1237
      %1855 = vmatmul.mubr.f32.gmra.mxu0 %v1236
      %v1856 = vpop.f32.mrf.mxu0
      %v1857 = vadd.f32 %v1712, %v1856
      %v1858 = vpop.f32.mrf.mxu0
      %1859 = vmatprep.mubr.f32.mxu0 %v1246
      %1860 = vmatmul.mubr.f32.gmra.mxu0 %v1245
      %v1861 = vpop.f32.mrf.mxu0
      %v1862 = vadd.f32 %v1717, %v1861
      %v1863 = vpop.f32.mrf.mxu0
      %1864 = vmatprep.mubr.f32.mxu0 %v1255
      %1865 = vmatmul.mubr.f32.gmra.mxu0 %v1254
      %v1866 = vpop.f32.mrf.mxu0
      %v1867 = vadd.f32 %v1722, %v1866
      %v1868 = vpop.f32.mrf.mxu0
      %1869 = vmatprep.mubr.f32.mxu0 %v1264
      %1870 = vmatmul.mubr.f32.gmra.mxu0 %v1263
      %v1871 = vpop.f32.mrf.mxu0
      %v1872 = vadd.f32 %v1727, %v1871
      %v1873 = vpop.f32.mrf.mxu0
      %1874 = vmatprep.mubr.f32.mxu0 %v1273
      %1875 = vmatmul.mubr.f32.gmra.mxu0 %v1272
      %v1876 = vpop.f32.mrf.mxu0
      %v1877 = vadd.f32 %v1732, %v1876
      %v1878 = vpop.f32.mrf.mxu0
      %1879 = vmatprep.mubr.f32.mxu0 %v1282
      %1880 = vmatmul.mubr.f32.gmra.mxu0 %v1281
      %v1881 = vpop.f32.mrf.mxu0
      %v1882 = vadd.f32 %v1737, %v1881
      %v1883 = vpop.f32.mrf.mxu0
      %1884 = vmatprep.mubr.f32.mxu0 %v1291
      %1885 = vmatmul.mubr.f32.gmra.mxu0 %v1290
      %v1886 = vpop.f32.mrf.mxu0
      %v1887 = vadd.f32 %v1742, %v1886
      %v1888 = vpop.f32.mrf.mxu0
      %1889 = vmatprep.mubr.f32.mxu0 %v1300
      %1890 = vmatmul.mubr.f32.gmra.mxu0 %v1299
      %v1891 = vpop.f32.mrf.mxu0
      %v1892 = vadd.f32 %v1747, %v1891
      %v1893 = vpop.f32.mrf.mxu0
      %1894 = vmatprep.mubr.f32.mxu0 %v1309
      %1895 = vmatmul.mubr.f32.gmra.mxu0 %v1308
      %v1896 = vpop.f32.mrf.mxu0
      %v1897 = vadd.f32 %v1752, %v1896
      %v1898 = vpop.f32.mrf.mxu0
      %1899 = vmatprep.mubr.f32.mxu0 %v1318
      %1900 = vmatmul.mubr.f32.gmra.mxu0 %v1317
      %v1901 = vpop.f32.mrf.mxu0
      %v1902 = vadd.f32 %v1757, %v1901
      %v1903 = vpop.f32.mrf.mxu0
      %1904 = vmatprep.mubr.f32.mxu0 %v1327
      %1905 = vmatmul.mubr.f32.gmra.mxu0 %v1326
      %v1906 = vpop.f32.mrf.mxu0
      %v1907 = vadd.f32 %v1762, %v1906
      %v1908 = vpop.f32.mrf.mxu0
      %1909 = vdwg.mxu0
      %1910 = vmatprep.subr.mxu0 0.0
      %1911 = vmatpush1.msra.mxu0 %v1442
      %1912 = vmatprep.subr.mxu0 0.0
      %1913 = vmatpush1.msra.mxu0 %v1441
      %1914 = vmatprep.subr.mxu0 0.0
      %1915 = vmatpush1.msra.mxu0 %v1440
      %1916 = vmatprep.subr.mxu0 0.0
      %1917 = vmatpush1.msra.mxu0 %v1439
      %1918 = vmatprep.subr.mxu0 0.0
      %1919 = vmatpush1.msra.mxu0 %v1438
      %1920 = vmatprep.subr.mxu0 0.0
      %1921 = vmatpush1.msra.mxu0 %v1437
      %1922 = vmatprep.subr.mxu0 0.0
      %1923 = vmatpush1.msra.mxu0 %v1436
      %1924 = vmatprep.subr.mxu0 0.0
      %1925 = vmatpush1.msra.mxu0 %v1435
      %1926 = vmatprep.subr.mxu0 0.0
      %1927 = vmatpush1.msra.mxu0 %v1434
      %1928 = vmatprep.subr.mxu0 0.0
      %1929 = vmatpush1.msra.mxu0 %v1433
      %1930 = vmatprep.subr.mxu0 0.0
      %1931 = vmatpush1.msra.mxu0 %v1432
      %1932 = vmatprep.subr.mxu0 0.0
      %1933 = vmatpush1.msra.mxu0 %v1431
      %1934 = vmatprep.subr.mxu0 0.0
      %1935 = vmatpush1.msra.mxu0 %v1430
      %1936 = vmatprep.subr.mxu0 0.0
      %1937 = vmatpush1.msra.mxu0 %v1429
      %1938 = vmatprep.subr.mxu0 0.0
      %1939 = vmatpush1.msra.mxu0 %v1428
      %1940 = vmatprep.subr.mxu0 0.0
      %1941 = vmatpush1.msra.mxu0 %v1427
      %1942 = vmatprep.subr.mxu0 0.0
      %1943 = vmatpush2.msra.mxu0 %v1458
      %1944 = vmatprep.subr.mxu0 0.0
      %1945 = vmatpush2.msra.mxu0 %v1457
      %1946 = vmatprep.subr.mxu0 0.0
      %1947 = vmatpush2.msra.mxu0 %v1456
      %1948 = vmatprep.subr.mxu0 0.0
      %1949 = vmatpush2.msra.mxu0 %v1455
      %1950 = vmatprep.subr.mxu0 0.0
      %1951 = vmatpush2.msra.mxu0 %v1454
      %1952 = vmatprep.subr.mxu0 0.0
      %1953 = vmatpush2.msra.mxu0 %v1453
      %1954 = vmatprep.subr.mxu0 0.0
      %1955 = vmatpush2.msra.mxu0 %v1452
      %1956 = vmatprep.subr.mxu0 0.0
      %1957 = vmatpush2.msra.mxu0 %v1451
      %1958 = vmatprep.subr.mxu0 0.0
      %1959 = vmatpush2.msra.mxu0 %v1450
      %1960 = vmatprep.subr.mxu0 0.0
      %1961 = vmatpush2.msra.mxu0 %v1449
      %1962 = vmatprep.subr.mxu0 0.0
      %1963 = vmatpush2.msra.mxu0 %v1448
      %1964 = vmatprep.subr.mxu0 0.0
      %1965 = vmatpush2.msra.mxu0 %v1447
      %1966 = vmatprep.subr.mxu0 0.0
      %1967 = vmatpush2.msra.mxu0 %v1446
      %1968 = vmatprep.subr.mxu0 0.0
      %1969 = vmatpush2.msra.mxu0 %v1445
      %1970 = vmatprep.subr.mxu0 0.0
      %1971 = vmatpush2.msra.mxu0 %v1444
      %1972 = vmatprep.subr.mxu0 0.0
      %1973 = vmatpush2.msra.mxu0 %v1443
      %1974 = vmatprep.mubr.f32.mxu0 %v1194
      %1975 = vmatmul.mubr.f32.gmra.mxu0 %v1193
      %v1976 = vpop.f32.mrf.mxu0
      %v1977 = vadd.f32 %v1832, %v1976
      %v1978 = vpop.f32.mrf.mxu0
      %1979 = vmatprep.mubr.f32.mxu0 %v1203
      %1980 = vmatmul.mubr.f32.gmra.mxu0 %v1202
      %v1981 = vpop.f32.mrf.mxu0
      %v1982 = vadd.f32 %v1837, %v1981
      %v1983 = vpop.f32.mrf.mxu0
      %1984 = vmatprep.mubr.f32.mxu0 %v1212
      %1985 = vmatmul.mubr.f32.gmra.mxu0 %v1211
      %v1986 = vpop.f32.mrf.mxu0
      %v1987 = vadd.f32 %v1842, %v1986
      %v1988 = vpop.f32.mrf.mxu0
      %1989 = vmatprep.mubr.f32.mxu0 %v1221
      %1990 = vmatmul.mubr.f32.gmra.mxu0 %v1220
      %v1991 = vpop.f32.mrf.mxu0
      %v1992 = vadd.f32 %v1847, %v1991
      %v1993 = vpop.f32.mrf.mxu0
      %1994 = vmatprep.mubr.f32.mxu0 %v1230
      %1995 = vmatmul.mubr.f32.gmra.mxu0 %v1229
      %v1996 = vpop.f32.mrf.mxu0
      %v1997 = vadd.f32 %v1852, %v1996
      %v1998 = vpop.f32.mrf.mxu0
      %1999 = vmatprep.mubr.f32.mxu0 %v1239
      %2000 = vmatmul.mubr.f32.gmra.mxu0 %v1238
      %v2001 = vpop.f32.mrf.mxu0
      %v2002 = vadd.f32 %v1857, %v2001
      %v2003 = vpop.f32.mrf.mxu0
      %2004 = vmatprep.mubr.f32.mxu0 %v1248
      %2005 = vmatmul.mubr.f32.gmra.mxu0 %v1247
      %v2006 = vpop.f32.mrf.mxu0
      %v2007 = vadd.f32 %v1862, %v2006
      %v2008 = vpop.f32.mrf.mxu0
      %2009 = vmatprep.mubr.f32.mxu0 %v1257
      %2010 = vmatmul.mubr.f32.gmra.mxu0 %v1256
      %v2011 = vpop.f32.mrf.mxu0
      %v2012 = vadd.f32 %v1867, %v2011
      %v2013 = vpop.f32.mrf.mxu0
      %2014 = vmatprep.mubr.f32.mxu0 %v1266
      %2015 = vmatmul.mubr.f32.gmra.mxu0 %v1265
      %v2016 = vpop.f32.mrf.mxu0
      %v2017 = vadd.f32 %v1872, %v2016
      %v2018 = vpop.f32.mrf.mxu0
      %2019 = vmatprep.mubr.f32.mxu0 %v1275
      %2020 = vmatmul.mubr.f32.gmra.mxu0 %v1274
      %v2021 = vpop.f32.mrf.mxu0
      %v2022 = vadd.f32 %v1877, %v2021
      %v2023 = vpop.f32.mrf.mxu0
      %2024 = vmatprep.mubr.f32.mxu0 %v1284
      %2025 = vmatmul.mubr.f32.gmra.mxu0 %v1283
      %v2026 = vpop.f32.mrf.mxu0
      %v2027 = vadd.f32 %v1882, %v2026
      %v2028 = vpop.f32.mrf.mxu0
      %2029 = vmatprep.mubr.f32.mxu0 %v1293
      %2030 = vmatmul.mubr.f32.gmra.mxu0 %v1292
      %v2031 = vpop.f32.mrf.mxu0
      %v2032 = vadd.f32 %v1887, %v2031
      %v2033 = vpop.f32.mrf.mxu0
      %2034 = vmatprep.mubr.f32.mxu0 %v1302
      %2035 = vmatmul.mubr.f32.gmra.mxu0 %v1301
      %v2036 = vpop.f32.mrf.mxu0
      %v2037 = vadd.f32 %v1892, %v2036
      %v2038 = vpop.f32.mrf.mxu0
      %2039 = vmatprep.mubr.f32.mxu0 %v1311
      %2040 = vmatmul.mubr.f32.gmra.mxu0 %v1310
      %v2041 = vpop.f32.mrf.mxu0
      %v2042 = vadd.f32 %v1897, %v2041
      %v2043 = vpop.f32.mrf.mxu0
      %2044 = vmatprep.mubr.f32.mxu0 %v1320
      %2045 = vmatmul.mubr.f32.gmra.mxu0 %v1319
      %v2046 = vpop.f32.mrf.mxu0
      %v2047 = vadd.f32 %v1902, %v2046
      %v2048 = vpop.f32.mrf.mxu0
      %2049 = vmatprep.mubr.f32.mxu0 %v1329
      %2050 = vmatmul.mubr.f32.gmra.mxu0 %v1328
      %v2051 = vpop.f32.mrf.mxu0
      %v2052 = vadd.f32 %v1907, %v2051
      %v2053 = vpop.f32.mrf.mxu0
      %2054 = vdwg.mxu0
      %2055 = vmatprep.subr.mxu0 0.0
      %2056 = vmatpush1.msra.mxu0 %v1474
      %2057 = vmatprep.subr.mxu0 0.0
      %2058 = vmatpush1.msra.mxu0 %v1473
      %2059 = vmatprep.subr.mxu0 0.0
      %2060 = vmatpush1.msra.mxu0 %v1472
      %2061 = vmatprep.subr.mxu0 0.0
      %2062 = vmatpush1.msra.mxu0 %v1471
      %2063 = vmatprep.subr.mxu0 0.0
      %2064 = vmatpush1.msra.mxu0 %v1470
      %2065 = vmatprep.subr.mxu0 0.0
      %2066 = vmatpush1.msra.mxu0 %v1469
      %2067 = vmatprep.subr.mxu0 0.0
      %2068 = vmatpush1.msra.mxu0 %v1468
      %2069 = vmatprep.subr.mxu0 0.0
      %2070 = vmatpush1.msra.mxu0 %v1467
      %2071 = vmatprep.subr.mxu0 0.0
      %2072 = vmatpush1.msra.mxu0 %v1466
      %2073 = vmatprep.subr.mxu0 0.0
      %2074 = vmatpush1.msra.mxu0 %v1465
      %2075 = vmatprep.subr.mxu0 0.0
      %2076 = vmatpush1.msra.mxu0 %v1464
      %2077 = vmatprep.subr.mxu0 0.0
      %2078 = vmatpush1.msra.mxu0 %v1463
      %2079 = vmatprep.subr.mxu0 0.0
      %2080 = vmatpush1.msra.mxu0 %v1462
      %2081 = vmatprep.subr.mxu0 0.0
      %2082 = vmatpush1.msra.mxu0 %v1461
      %2083 = vmatprep.subr.mxu0 0.0
      %2084 = vmatpush1.msra.mxu0 %v1460
      %2085 = vmatprep.subr.mxu0 0.0
      %2086 = vmatpush1.msra.mxu0 %v1459
      %2087 = vmatprep.subr.mxu0 0.0
      %2088 = vmatpush2.msra.mxu0 0.0
      %2089 = vmatprep.subr.mxu0 0.0
      %2090 = vmatpush2.msra.mxu0 0.0
      %2091 = vmatprep.subr.mxu0 0.0
      %2092 = vmatpush2.msra.mxu0 0.0
      %2093 = vmatprep.subr.mxu0 0.0
      %2094 = vmatpush2.msra.mxu0 0.0
      %2095 = vmatprep.subr.mxu0 0.0
      %2096 = vmatpush2.msra.mxu0 0.0
      %2097 = vmatprep.subr.mxu0 0.0
      %2098 = vmatpush2.msra.mxu0 0.0
      %2099 = vmatprep.subr.mxu0 0.0
      %2100 = vmatpush2.msra.mxu0 0.0
      %2101 = vmatprep.subr.mxu0 0.0
      %2102 = vmatpush2.msra.mxu0 0.0
      %2103 = vmatprep.subr.mxu0 0.0
      %2104 = vmatpush2.msra.mxu0 0.0
      %2105 = vmatprep.subr.mxu0 0.0
      %2106 = vmatpush2.msra.mxu0 0.0
      %2107 = vmatprep.subr.mxu0 0.0
      %2108 = vmatpush2.msra.mxu0 0.0
      %2109 = vmatprep.subr.mxu0 0.0
      %2110 = vmatpush2.msra.mxu0 0.0
      %2111 = vmatprep.subr.mxu0 0.0
      %2112 = vmatpush2.msra.mxu0 0.0
      %2113 = vmatprep.subr.mxu0 0.0
      %2114 = vmatpush2.msra.mxu0 0.0
      %2115 = vmatprep.subr.mxu0 0.0
      %2116 = vmatpush2.msra.mxu0 0.0
      %2117 = vmatprep.subr.mxu0 0.0
      %2118 = vmatpush2.msra.mxu0 0.0
      %2119 = vmatprep.mubr.f32.mxu0 0.0
      %2120 = vmatmul.mubr.f32.gmra.mxu0 %v1195
      %v2121 = vpop.f32.mrf.mxu0
      %v2122 = vadd.f32 %v1977, %v2121
      %v2123 = vpop.f32.mrf.mxu0
      %2124 = vmatprep.mubr.f32.mxu0 0.0
      %2125 = vmatmul.mubr.f32.gmra.mxu0 %v1204
      %v2126 = vpop.f32.mrf.mxu0
      %v2127 = vadd.f32 %v1982, %v2126
      %v2128 = vpop.f32.mrf.mxu0
      %2129 = vmatprep.mubr.f32.mxu0 0.0
      %2130 = vmatmul.mubr.f32.gmra.mxu0 %v1213
      %v2131 = vpop.f32.mrf.mxu0
      %v2132 = vadd.f32 %v1987, %v2131
      %v2133 = vpop.f32.mrf.mxu0
      %2134 = vmatprep.mubr.f32.mxu0 0.0
      %2135 = vmatmul.mubr.f32.gmra.mxu0 %v1222
      %v2136 = vpop.f32.mrf.mxu0
      %v2137 = vadd.f32 %v1992, %v2136
      %v2138 = vpop.f32.mrf.mxu0
      %2139 = vmatprep.mubr.f32.mxu0 0.0
      %2140 = vmatmul.mubr.f32.gmra.mxu0 %v1231
      %v2141 = vpop.f32.mrf.mxu0
      %v2142 = vadd.f32 %v1997, %v2141
      %v2143 = vpop.f32.mrf.mxu0
      %2144 = vmatprep.mubr.f32.mxu0 0.0
      %2145 = vmatmul.mubr.f32.gmra.mxu0 %v1240
      %v2146 = vpop.f32.mrf.mxu0
      %v2147 = vadd.f32 %v2002, %v2146
      %v2148 = vpop.f32.mrf.mxu0
      %2149 = vmatprep.mubr.f32.mxu0 0.0
      %2150 = vmatmul.mubr.f32.gmra.mxu0 %v1249
      %v2151 = vpop.f32.mrf.mxu0
      %v2152 = vadd.f32 %v2007, %v2151
      %v2153 = vpop.f32.mrf.mxu0
      %2154 = vmatprep.mubr.f32.mxu0 0.0
      %2155 = vmatmul.mubr.f32.gmra.mxu0 %v1258
      %v2156 = vpop.f32.mrf.mxu0
      %v2157 = vadd.f32 %v2012, %v2156
      %v2158 = vpop.f32.mrf.mxu0
      %2159 = vmatprep.mubr.f32.mxu0 0.0
      %2160 = vmatmul.mubr.f32.gmra.mxu0 %v1267
      %v2161 = vpop.f32.mrf.mxu0
      %v2162 = vadd.f32 %v2017, %v2161
      %v2163 = vpop.f32.mrf.mxu0
      %2164 = vmatprep.mubr.f32.mxu0 0.0
      %2165 = vmatmul.mubr.f32.gmra.mxu0 %v1276
      %v2166 = vpop.f32.mrf.mxu0
      %v2167 = vadd.f32 %v2022, %v2166
      %v2168 = vpop.f32.mrf.mxu0
      %2169 = vmatprep.mubr.f32.mxu0 0.0
      %2170 = vmatmul.mubr.f32.gmra.mxu0 %v1285
      %v2171 = vpop.f32.mrf.mxu0
      %v2172 = vadd.f32 %v2027, %v2171
      %v2173 = vpop.f32.mrf.mxu0
      %2174 = vmatprep.mubr.f32.mxu0 0.0
      %2175 = vmatmul.mubr.f32.gmra.mxu0 %v1294
      %v2176 = vpop.f32.mrf.mxu0
      %v2177 = vadd.f32 %v2032, %v2176
      %v2178 = vpop.f32.mrf.mxu0
      %2179 = vmatprep.mubr.f32.mxu0 0.0
      %2180 = vmatmul.mubr.f32.gmra.mxu0 %v1303
      %v2181 = vpop.f32.mrf.mxu0
      %v2182 = vadd.f32 %v2037, %v2181
      %v2183 = vpop.f32.mrf.mxu0
      %2184 = vmatprep.mubr.f32.mxu0 0.0
      %2185 = vmatmul.mubr.f32.gmra.mxu0 %v1312
      %v2186 = vpop.f32.mrf.mxu0
      %v2187 = vadd.f32 %v2042, %v2186
      %v2188 = vpop.f32.mrf.mxu0
      %2189 = vmatprep.mubr.f32.mxu0 0.0
      %2190 = vmatmul.mubr.f32.gmra.mxu0 %v1321
      %v2191 = vpop.f32.mrf.mxu0
      %v2192 = vadd.f32 %v2047, %v2191
      %v2193 = vpop.f32.mrf.mxu0
      %2194 = vmatprep.mubr.f32.mxu0 0.0
      %2195 = vmatmul.mubr.f32.gmra.mxu0 %v1330
      %v2196 = vpop.f32.mrf.mxu0
      %v2197 = vadd.f32 %v2052, %v2196
      %v2198 = vpop.f32.mrf.mxu0
      %2199 = vdwg.mxu0
      %v2200 = vmul.f32 %v2122, %v2122
      %v2201 = vmul.f32 %v2127, %v2127
      %v2202 = vmul.f32 %v2132, %v2132
      %v2203 = vmul.f32 %v2137, %v2137
      %v2204 = vmul.f32 %v2142, %v2142
      %v2205 = vmul.f32 %v2147, %v2147
      %v2206 = vmul.f32 %v2152, %v2152
      %v2207 = vmul.f32 %v2157, %v2157
      %v2208 = vmul.f32 %v2162, %v2162
      %v2209 = vmul.f32 %v2167, %v2167
      %v2210 = vmul.f32 %v2172, %v2172
      %v2211 = vmul.f32 %v2177, %v2177
      %v2212 = vmul.f32 %v2182, %v2182
      %v2213 = vmul.f32 %v2187, %v2187
      %v2214 = vmul.f32 %v2192, %v2192
      %v2215 = vmul.f32 %v2197, %v2197
      %v2216 = vadd.f32 %v2200, %v2201
      %v2217 = vadd.f32 %v2216, %v2202
      %v2218 = vadd.f32 %v2217, %v2203
      %v2219 = vadd.f32 %v2218, %v2204
      %v2220 = vadd.f32 %v2219, %v2205
      %v2221 = vadd.f32 %v2220, %v2206
      %v2222 = vadd.f32 %v2221, %v2207
      %v2223 = vadd.f32 %v2222, %v2208
      %v2224 = vadd.f32 %v2223, %v2209
      %v2225 = vadd.f32 %v2224, %v2210
      %v2226 = vadd.f32 %v2225, %v2211
      %v2227 = vadd.f32 %v2226, %v2212
      %v2228 = vadd.f32 %v2227, %v2213
      %v2229 = vadd.f32 %v2228, %v2214
      %v2230 = vadd.f32 %v2229, %v2215
      %v2231 = vrot.slane %v2230, 4
      %v2232 = vadd.f32 %v2230, %v2231
      %v2233 = vrot.slane %v2232, 2
      %v2234 = vadd.f32 %v2232, %v2233
      %v2235 = vrot.slane %v2234, 1
      %v2236 = vadd.f32 %v2234, %v2235
      %2237 = vst [vmem:[%s200] sm:$0x1] %v2236
      %s2238 = smul.u32 %s18, 2
      %s2239 = sadd.s32 %s2238, %s19
      %p2240 = scmp.lt.s32.totalorder %s2239, 3
      %s2241 = scalar_select %p2240, %s2239, 3
      %s2242 = scalar_lea.vmem %s3, %s2241
      // Predicated region
      $region33: #{feat_loss.1} parent=31 // pred_check
        %p2243 = pneg %p118
      $region34: #{feat_loss.1} parent=31 // pred_check_branch
        %2245 = sbr.rel (%p2243) target = $region36
      $region35: #{feat_loss.1} parent=31 // pred_region
        %s2246 = smul.u32 %s18, 2
        %s2247 = sadd.s32 %s2246, %s19
      $region36: #{feat_loss.1} parent=31 // pred_fallthru
        _
    $region32: #{feat_loss.1} parent=5 // pred_fallthru
      _
    %p2248 = scmp.le.s32.totalorder 2, %s9
    // Predicated region
    $region37: #{feat_loss.1} parent=5 // pred_check
      %p2249 = pneg %p2248
    $region38: #{feat_loss.1} parent=5 // pred_check_branch
      %2251 = sbr.rel (%p2249) target = $region40
    $region39: #{feat_loss.1} parent=5 // pred_region
      %s2252 = ssub.s32 %s9, 2
      // Predicated region
      $region41: #{feat_loss.1} parent=39 // pred_check
        %p2253 = pneg %p124
      $region42: #{feat_loss.1} parent=39 // pred_check_branch
        %2255 = sbr.rel (%p2253) target = $region44
      $region43: #{feat_loss.1} parent=39 // pred_region
        %s2256 = smul.u32 %s20, 2
        %s2257 = sadd.s32 %s2256, %s21
        %p2258 = scmp.lt.s32.totalorder %s2257, 3
        %s2259 = scalar_select %p2258, %s2257, 3
        %s2260 = scalar_lea.vmem %s3, %s2259
      $region44: #{feat_loss.1} parent=39 // pred_fallthru
        _
    $region40: #{feat_loss.1} parent=5 // pred_fallthru
      _
  $region6: #{feat_loss.1} parent=0 // loop_footer
    %s13 = sadd.s32 1, %s9
  $region7: #{feat_loss.1} parent=0 // loop_footer_branch
    %8 = sbr.rel target = $region3
  $region8: #{feat_loss.1} parent=0 // loop_exit
    _

</llo_original>
